<compile_context>
chip_gen: v5e
topology: v5e:2x2
jax: 0.10.0
libtpu: 0.0.40
codegen_flags: <defaults>
</compile_context>

<pallas_src>
import functools

import jax
import jax.numpy as jnp
import numpy as np
from jax.experimental import pallas as pl
from jax.experimental.pallas import tpu as pltpu

LANE = 128
SUBLANE = 8


def _round_up(n, m):
  return ((n + m - 1) // m) * m


# ----------------------------------------------------------------------------
# Kernel
# ----------------------------------------------------------------------------
def _layernorm(x, w, b, eps=1e-5):
  # E[x^2] - E[x]^2: both reductions read x directly (parallel XLU passes).
  mu = jnp.mean(x, axis=-1, keepdims=True)
  var = jnp.mean(x * x, axis=-1, keepdims=True) - mu * mu
  return (x - mu) * jax.lax.rsqrt(var + eps) * w + b


def oran_transformer_kernel(
    x_ref, pe_ref, pool_ref, w_in_ref,
    qkv_w_ref, qkv_b_ref, out_w_ref, out_b_ref,
    ln1_w_ref, ln1_b_ref, ln2_w_ref, ln2_b_ref,
    ff1_w_ref, ff1_b_ref, ff2_w_ref, ff2_b_ref,
    wc1_ref, bc1_ref, wc2_ref, bc2_ref,
    o_ref,
    *, batch: int, seq: int, d_model: int, nhead: int, num_layers: int):
  B, S, D = batch, seq, d_model
  Dh = D // nhead

  # input projection: Linear(input_dim -> d_model) on the padded (B*S, 128)
  # input (padded rows/cols are zero, so the result is exact).  b_in and the
  # positional encoding are pre-folded into pe_ref on the host.
  h = jnp.dot(x_ref[...], w_in_ref[...],
              preferred_element_type=jnp.float32)                    # (B*S, D)
  h = h + pe_ref[...]

  # transformer encoder layers (post-norm, ReLU FFN, eval-mode dropout)
  for l in range(num_layers):
    qkv_w, qkv_b = qkv_w_ref[l], qkv_b_ref[l]
    out_w, out_b = out_w_ref[l], out_b_ref[l]
    ln1_w, ln1_b = ln1_w_ref[l], ln1_b_ref[l]
    ln2_w, ln2_b = ln2_w_ref[l], ln2_b_ref[l]
    ff1_w, ff1_b = ff1_w_ref[l], ff1_b_ref[l]
    ff2_w, ff2_b = ff2_w_ref[l], ff2_b_ref[l]

    # --- self-attention block ---
    # qkv_w is lane-padded to 128 columns (3*D = 96 real); the 1/sqrt(Dh)
    # softmax scale is already folded into the Q columns of qkv_w / qkv_b.
    qkv = jnp.dot(h, qkv_w, preferred_element_type=jnp.float32) + qkv_b
    q = qkv[:, 0 * D:1 * D].reshape(B, S, D)
    k = qkv[:, 1 * D:2 * D].reshape(B, S, D)
    v = qkv[:, 2 * D:3 * D].reshape(B, S, D)
    # one K relayout per layer so the per-head Q.K^T needs no implicit
    # per-(batch, head) transpose
    kT = jnp.transpose(k, (0, 2, 1))                                 # (B, D, S)

    ctx_parts = []
    for hd in range(nhead):
      q_h = q[:, :, hd * Dh:(hd + 1) * Dh]                           # (B, S, Dh)
      kT_h = kT[:, hd * Dh:(hd + 1) * Dh, :]                         # (B, Dh, S)
      v_h = v[:, :, hd * Dh:(hd + 1) * Dh]                           # (B, S, Dh)
      s = jnp.einsum('bqd,bdk->bqk', q_h, kT_h,
                     preferred_element_type=jnp.float32)             # (B, S, S)
      s = s - jnp.max(s, axis=-1, keepdims=True)
      p = jnp.exp(s)
      p = p * pl.reciprocal(jnp.sum(p, axis=-1, keepdims=True), approx=True)
      ctx_h = jnp.einsum('bqk,bkd->bqd', p, v_h,
                         preferred_element_type=jnp.float32)          # (B, S, Dh)
      ctx_parts.append(ctx_h.reshape(B * S, Dh))

    # lane-concatenate the heads, then ONE (B*S, D) @ (D, D) output projection
    ctx = jnp.concatenate(ctx_parts, axis=-1)                        # (B*S, D)
    attn = jnp.dot(ctx, out_w, preferred_element_type=jnp.float32) + out_b
    h = _layernorm(h + attn, ln1_w, ln1_b)

    # --- feed-forward block ---
    f = jnp.dot(h, ff1_w, preferred_element_type=jnp.float32) + ff1_b
    f = jnp.maximum(f, 0.0)
    f = jnp.dot(f, ff2_w, preferred_element_type=jnp.float32) + ff2_b
    h = _layernorm(h + f, ln2_w, ln2_b)

  # mean over the sequence axis as an MXU matmul against the host-built
  # (B, B*S) pooling matrix (1/S entries) — avoids an XLU sublane reduce.
  pooled = jnp.dot(pool_ref[...], h,
                   preferred_element_type=jnp.float32)               # (B, D)

  # classifier head (N dims lane-padded to 128; padded weights/biases are
  # zero so the padded lanes of the output stay exactly zero).
  c = jnp.dot(pooled, wc1_ref[...],
              preferred_element_type=jnp.float32) + bc1_ref[...]
  c = jnp.maximum(c, 0.0)
  c = jnp.dot(c, wc2_ref[...],
              preferred_element_type=jnp.float32) + bc2_ref[...]
  o_ref[...] = c                                                     # (B, 128)


# ----------------------------------------------------------------------------
# Host-side padding / folding (one-time layout plumbing) + wrapper
# ----------------------------------------------------------------------------
def _pad_axis(a, axis, target):
  pad = target - a.shape[axis]
  if pad <= 0:
    return a
  widths = [(0, 0)] * a.ndim
  widths[axis] = (0, pad)
  return jnp.pad(a, widths)


def prepare_padded_params(params, *, batch, seq, nhead):
  """Zero-pad sub-128 operand dims, fold scale/bias, build pe & pool slabs."""
  in_dim, d_model = params['w_in'].shape
  in_pad = _round_up(in_dim, LANE)
  qkv_pad = _round_up(params['qkv_w'].shape[-1], LANE)
  hid_pad = _round_up(params['wc1'].shape[-1], LANE)
  cls_pad = _round_up(params['wc2'].shape[-1], LANE)
  Dh = d_model // nhead
  scale = 1.0 / np.sqrt(np.float32(Dh))

  # pe[:B] broadcast over the sequence axis (the module's quirk), flattened to
  # (B*S, D), with b_in folded in.
  pe_rep = jnp.repeat(params['pe'][:batch], seq, axis=0) + params['b_in']

  # fold the 1/sqrt(Dh) softmax scale into the Q columns of the in-projection
  qkv_w = params['qkv_w'].at[:, :, :d_model].multiply(scale)
  qkv_b = params['qkv_b'].at[:, :, :d_model].multiply(scale)

  # (B, B*S) sequence-mean pooling matrix
  pool = (jnp.kron(jnp.eye(batch, dtype=jnp.float32),
                   jnp.ones((1, seq), jnp.float32)) / float(seq))

  return dict(
      pe_rep=pe_rep,
      pool=pool,
      w_in=_pad_axis(params['w_in'], 0, in_pad),
      qkv_w=_pad_axis(qkv_w, 2, qkv_pad),
      qkv_b=_pad_axis(qkv_b, 2, qkv_pad),
      out_w=params['out_w'], out_b=params['out_b'],
      ln1_w=params['ln1_w'], ln1_b=params['ln1_b'],
      ln2_w=params['ln2_w'], ln2_b=params['ln2_b'],
      ff1_w=params['ff1_w'], ff1_b=params['ff1_b'],
      ff2_w=params['ff2_w'], ff2_b=params['ff2_b'],
      wc1=_pad_axis(params['wc1'], 1, hid_pad),
      bc1=_pad_axis(params['bc1'], 1, hid_pad),
      wc2=_pad_axis(_pad_axis(params['wc2'], 0, hid_pad), 1, cls_pad),
      bc2=_pad_axis(params['bc2'], 1, cls_pad),
  )


def oran_transformer_forward(x, pp, *, d_model, nhead, num_layers, num_classes):
  B, S, in_dim = x.shape
  in_pad = pp['w_in'].shape[0]
  out_lanes = pp['wc2'].shape[1]
  rows = B * S  # 16 here — already a multiple of 8, so no row padding needed

  # pad features to 128 lanes and flatten to the 2-D (B*S, 128) slab
  x_p = jnp.pad(x, ((0, 0), (0, 0), (0, in_pad - in_dim))).reshape(rows, in_pad)

  args = (x_p, pp['pe_rep'], pp['pool'], pp['w_in'],
          pp['qkv_w'], pp['qkv_b'], pp['out_w'], pp['out_b'],
          pp['ln1_w'], pp['ln1_b'], pp['ln2_w'], pp['ln2_b'],
          pp['ff1_w'], pp['ff1_b'], pp['ff2_w'], pp['ff2_b'],
          pp['wc1'], pp['bc1'], pp['wc2'], pp['bc2'])

  D = d_model
  Dh = D // nhead
  ff = pp['ff1_w'].shape[-1]
  qkv_n = pp['qkv_w'].shape[-1]
  hid = pp['wc1'].shape[-1]
  flops = (2 * rows * in_pad * D
           + num_layers * (2 * rows * D * qkv_n
                           + B * nhead * (2 * S * Dh * S + 2 * S * S * Dh)
                           + 2 * rows * D * D
                           + 2 * rows * D * ff + 2 * rows * ff * D)
           + 2 * B * rows * D
           + 2 * B * D * hid + 2 * B * hid * out_lanes)
  transcendentals = num_layers * (B * nhead * S * (S + 1) + 2 * rows)
  bytes_accessed = 4 * (sum(int(a.size) for a in args) + B * out_lanes)

  # NOTE: gridless single call — the whole problem is <1 MiB of VMEM on all
  # generations.  At realistic batch sizes, add grid=(ceil(B/TB),) with
  # dimension_semantics=("parallel",) (v7x: feeds both TensorCores) and
  # stream per-layer weights; keep M >= 256 (v5e: >= 128) rows per matmul.
  out = pl.pallas_call(
      functools.partial(oran_transformer_kernel, batch=B, seq=S,
                        d_model=d_model, nhead=nhead, num_layers=num_layers),
      out_shape=jax.ShapeDtypeStruct((B, out_lanes), jnp.float32),
      in_specs=[pl.BlockSpec(memory_space=pltpu.MemorySpace.VMEM)] * len(args),
      out_specs=pl.BlockSpec(memory_space=pltpu.MemorySpace.VMEM),
      cost_estimate=pl.CostEstimate(flops=int(flops),
                                    transcendentals=int(transcendentals),
                                    bytes_accessed=int(bytes_accessed)),
  )(*args)
  return out[:, :num_classes]


# ----------------------------------------------------------------------------
# Pure-JAX reference (same math, unpadded params) for a correctness check.
# ----------------------------------------------------------------------------
def oran_transformer_ref(x, params, *, num_layers, nhead):
  B, S, _ = x.shape
  D = params['w_in'].shape[1]
  Dh = D // nhead
  h = x @ params['w_in'] + params['b_in']
  h = h + params['pe'][:B][:, None, :]
  for l in range(num_layers):
    qkv = h.reshape(B * S, 3 * D // 3 * 1 and B * S, D)[0] if False else \
        h.reshape(B * S, D) @ params['qkv_w'][l] + params['qkv_b'][l]
    q = qkv[:, :D].reshape(B, S, nhead, Dh)
    k = qkv[:, D:2 * D].reshape(B, S, nhead, Dh)
    v = qkv[:, 2 * D:].reshape(B, S, nhead, Dh)
    s = jnp.einsum('bqhd,bkhd->bhqk', q, k) / jnp.sqrt(jnp.float32(Dh))
    p = jax.nn.softmax(s, axis=-1)
    ctx = jnp.einsum('bhqk,bkhd->bqhd', p, v).reshape(B * S, D)
    attn = (ctx @ params['out_w'][l] + params['out_b'][l]).reshape(B, S, D)

    def ln(z, w, b):
      mu = z.mean(-1, keepdims=True)
      var = ((z - mu) ** 2).mean(-1, keepdims=True)
      return (z - mu) / jnp.sqrt(var + 1e-5) * w + b

    h = ln(h + attn, params['ln1_w'][l], params['ln1_b'][l])
    f = jnp.maximum(h.reshape(B * S, D) @ params['ff1_w'][l]
                    + params['ff1_b'][l], 0.0)
    f = (f @ params['ff2_w'][l] + params['ff2_b'][l]).reshape(B, S, D)
    h = ln(h + f, params['ln2_w'][l], params['ln2_b'][l])
  pooled = h.mean(axis=1)
  c = jnp.maximum(pooled @ params['wc1'] + params['bc1'], 0.0)
  return c @ params['wc2'] + params['bc2']


def make_positional_encoding(d_model, max_len=5000):
  pe = np.zeros((max_len, d_model), dtype=np.float32)
  position = np.arange(0, max_len, dtype=np.float32)[:, None]
  div_term = np.exp(np.arange(0, d_model, 2, dtype=np.float32)
                    * (-np.log(10000.0) / d_model))
  pe[:, 0::2] = np.sin(position * div_term)
  pe[:, 1::2] = np.cos(position * div_term)
  return jnp.asarray(pe)


def init_params(key, *, input_dim, d_model, num_layers, num_classes):
  ff = 4 * d_model
  ks = jax.random.split(key, 16)
  std = 0.02
  return dict(
      pe=make_positional_encoding(d_model),
      w_in=jax.random.normal(ks[0], (input_dim, d_model), jnp.float32) * std,
      b_in=jax.random.normal(ks[1], (1, d_model), jnp.float32) * std,
      qkv_w=jax.random.normal(ks[2], (num_layers, d_model, 3 * d_model), jnp.float32) * std,
      qkv_b=jax.random.normal(ks[3], (num_layers, 1, 3 * d_model), jnp.float32) * std,
      out_w=jax.random.normal(ks[4], (num_layers, d_model, d_model), jnp.float32) * std,
      out_b=jax.random.normal(ks[5], (num_layers, 1, d_model), jnp.float32) * std,
      ln1_w=jnp.ones((num_layers, 1, d_model), jnp.float32),
      ln1_b=jnp.zeros((num_layers, 1, d_model), jnp.float32),
      ln2_w=jnp.ones((num_layers, 1, d_model), jnp.float32),
      ln2_b=jnp.zeros((num_layers, 1, d_model), jnp.float32),
      ff1_w=jax.random.normal(ks[6], (num_layers, d_model, ff), jnp.float32) * std,
      ff1_b=jax.random.normal(ks[7], (num_layers, 1, ff), jnp.float32) * std,
      ff2_w=jax.random.normal(ks[8], (num_layers, ff, d_model), jnp.float32) * std,
      ff2_b=jax.random.normal(ks[9], (num_layers, 1, d_model), jnp.float32) * std,
      wc1=jax.random.normal(ks[10], (d_model, d_model // 2), jnp.float32) * std,
      bc1=jax.random.normal(ks[11], (1, d_model // 2), jnp.float32) * std,
      wc2=jax.random.normal(ks[12], (d_model // 2, num_classes), jnp.float32) * std,
      bc2=jax.random.normal(ks[13], (1, num_classes), jnp.float32) * std,
  )


if __name__ == "__main__":
  B, S, IN_DIM = 2, 8, 16
  D_MODEL, NHEAD, NUM_LAYERS, NUM_CLASSES = 32, 4, 2, 5

  key = jax.random.PRNGKey(0)
  k_x, k_p = jax.random.split(key)
  x = jax.random.normal(k_x, (B, S, IN_DIM), jnp.float32)
  params = init_params(k_p, input_dim=IN_DIM, d_model=D_MODEL,
                       num_layers=NUM_LAYERS, num_classes=NUM_CLASSES)
  padded = prepare_padded_params(params, batch=B, seq=S, nhead=NHEAD)

  out = oran_transformer_forward(x, padded, d_model=D_MODEL, nhead=NHEAD,
                                 num_layers=NUM_LAYERS,
                                 num_classes=NUM_CLASSES)
  out = jax.block_until_ready(out)

  ref = jax.block_until_ready(
      oran_transformer_ref(x, params, num_layers=NUM_LAYERS, nhead=NHEAD))
  assert out.shape == (B, NUM_CLASSES), out.shape
  # tolerance 2e-3: softmax denominator uses the EUP approximate reciprocal
  # and layernorm uses the E[x^2]-E[x]^2 variance form; observed error is far
  # below this bound.
  assert jnp.allclose(out, ref, rtol=2e-3, atol=2e-3), (out, ref)

  print("KERNEL_OK")
</pallas_src>

<mosaic_0001>
module attributes {stable_mosaic.version = 11 : i64} {
  func.func @oran_transformer_kernel(%arg0: memref<16x128xf32, #tpu.memory_space<vmem>>, %arg1: memref<16x32xf32, #tpu.memory_space<vmem>>, %arg2: memref<2x16xf32, #tpu.memory_space<vmem>>, %arg3: memref<128x32xf32, #tpu.memory_space<vmem>>, %arg4: memref<2x32x128xf32, #tpu.memory_space<vmem>>, %arg5: memref<2x1x128xf32, #tpu.memory_space<vmem>>, %arg6: memref<2x32x32xf32, #tpu.memory_space<vmem>>, %arg7: memref<2x1x32xf32, #tpu.memory_space<vmem>>, %arg8: memref<2x1x32xf32, #tpu.memory_space<vmem>>, %arg9: memref<2x1x32xf32, #tpu.memory_space<vmem>>, %arg10: memref<2x1x32xf32, #tpu.memory_space<vmem>>, %arg11: memref<2x1x32xf32, #tpu.memory_space<vmem>>, %arg12: memref<2x32x128xf32, #tpu.memory_space<vmem>>, %arg13: memref<2x1x128xf32, #tpu.memory_space<vmem>>, %arg14: memref<2x128x32xf32, #tpu.memory_space<vmem>>, %arg15: memref<2x1x32xf32, #tpu.memory_space<vmem>>, %arg16: memref<32x128xf32, #tpu.memory_space<vmem>>, %arg17: memref<1x128xf32, #tpu.memory_space<vmem>>, %arg18: memref<128x128xf32, #tpu.memory_space<vmem>>, %arg19: memref<1x128xf32, #tpu.memory_space<vmem>>, %arg20: memref<2x128xf32, #tpu.memory_space<vmem>>) attributes {dimension_semantics = [], scalar_prefetch = 0 : i64, scratch_operands = 0 : i64, tpu.core_type = #tpu.core_type<tc>} {
    %c0 = arith.constant 0 : index
    %c0_0 = arith.constant 0 : index
    %0 = vector.load %arg0[%c0, %c0_0] : memref<16x128xf32, #tpu.memory_space<vmem>>, vector<16x128xf32>
    %c0_1 = arith.constant 0 : index
    %c0_2 = arith.constant 0 : index
    %1 = vector.load %arg3[%c0_1, %c0_2] : memref<128x32xf32, #tpu.memory_space<vmem>>, vector<128x32xf32>
    %cst = arith.constant dense<0.000000e+00> : vector<16x32xf32>
    %2 = tpu.matmul %0, %1, %cst {dimension_numbers = #tpu.dot_dimension_numbers<[1], [0], [0], [1], [0, 0, 1, 1], [], []>} : vector<16x128xf32>, vector<128x32xf32>, vector<16x32xf32> -> vector<16x32xf32>
    %c0_3 = arith.constant 0 : index
    %c0_4 = arith.constant 0 : index
    %3 = vector.load %arg1[%c0_3, %c0_4] : memref<16x32xf32, #tpu.memory_space<vmem>>, vector<16x32xf32>
    %4 = arith.addf %2, %3 : vector<16x32xf32>
    %c0_5 = arith.constant 0 : index
    %c0_6 = arith.constant 0 : index
    %c0_7 = arith.constant 0 : index
    %5 = vector.load %arg4[%c0_5, %c0_6, %c0_7] : memref<2x32x128xf32, #tpu.memory_space<vmem>>, vector<1x32x128xf32>
    %6 = vector.shape_cast %5 : vector<1x32x128xf32> to vector<32x128xf32>
    %c0_8 = arith.constant 0 : index
    %c0_9 = arith.constant 0 : index
    %c0_10 = arith.constant 0 : index
    %7 = vector.load %arg5[%c0_8, %c0_9, %c0_10] : memref<2x1x128xf32, #tpu.memory_space<vmem>>, vector<1x1x128xf32>
    %8 = vector.shape_cast %7 : vector<1x1x128xf32> to vector<1x128xf32>
    %c0_11 = arith.constant 0 : index
    %c0_12 = arith.constant 0 : index
    %c0_13 = arith.constant 0 : index
    %9 = vector.load %arg6[%c0_11, %c0_12, %c0_13] : memref<2x32x32xf32, #tpu.memory_space<vmem>>, vector<1x32x32xf32>
    %10 = vector.shape_cast %9 : vector<1x32x32xf32> to vector<32x32xf32>
    %c0_14 = arith.constant 0 : index
    %c0_15 = arith.constant 0 : index
    %c0_16 = arith.constant 0 : index
    %11 = vector.load %arg7[%c0_14, %c0_15, %c0_16] : memref<2x1x32xf32, #tpu.memory_space<vmem>>, vector<1x1x32xf32>
    %12 = vector.shape_cast %11 : vector<1x1x32xf32> to vector<1x32xf32>
    %c0_17 = arith.constant 0 : index
    %c0_18 = arith.constant 0 : index
    %c0_19 = arith.constant 0 : index
    %13 = vector.load %arg8[%c0_17, %c0_18, %c0_19] : memref<2x1x32xf32, #tpu.memory_space<vmem>>, vector<1x1x32xf32>
    %14 = vector.shape_cast %13 : vector<1x1x32xf32> to vector<1x32xf32>
    %c0_20 = arith.constant 0 : index
    %c0_21 = arith.constant 0 : index
    %c0_22 = arith.constant 0 : index
    %15 = vector.load %arg9[%c0_20, %c0_21, %c0_22] : memref<2x1x32xf32, #tpu.memory_space<vmem>>, vector<1x1x32xf32>
    %16 = vector.shape_cast %15 : vector<1x1x32xf32> to vector<1x32xf32>
    %c0_23 = arith.constant 0 : index
    %c0_24 = arith.constant 0 : index
    %c0_25 = arith.constant 0 : index
    %17 = vector.load %arg10[%c0_23, %c0_24, %c0_25] : memref<2x1x32xf32, #tpu.memory_space<vmem>>, vector<1x1x32xf32>
    %18 = vector.shape_cast %17 : vector<1x1x32xf32> to vector<1x32xf32>
    %c0_26 = arith.constant 0 : index
    %c0_27 = arith.constant 0 : index
    %c0_28 = arith.constant 0 : index
    %19 = vector.load %arg11[%c0_26, %c0_27, %c0_28] : memref<2x1x32xf32, #tpu.memory_space<vmem>>, vector<1x1x32xf32>
    %20 = vector.shape_cast %19 : vector<1x1x32xf32> to vector<1x32xf32>
    %c0_29 = arith.constant 0 : index
    %c0_30 = arith.constant 0 : index
    %c0_31 = arith.constant 0 : index
    %21 = vector.load %arg12[%c0_29, %c0_30, %c0_31] : memref<2x32x128xf32, #tpu.memory_space<vmem>>, vector<1x32x128xf32>
    %22 = vector.shape_cast %21 : vector<1x32x128xf32> to vector<32x128xf32>
    %c0_32 = arith.constant 0 : index
    %c0_33 = arith.constant 0 : index
    %c0_34 = arith.constant 0 : index
    %23 = vector.load %arg13[%c0_32, %c0_33, %c0_34] : memref<2x1x128xf32, #tpu.memory_space<vmem>>, vector<1x1x128xf32>
    %24 = vector.shape_cast %23 : vector<1x1x128xf32> to vector<1x128xf32>
    %c0_35 = arith.constant 0 : index
    %c0_36 = arith.constant 0 : index
    %c0_37 = arith.constant 0 : index
    %25 = vector.load %arg14[%c0_35, %c0_36, %c0_37] : memref<2x128x32xf32, #tpu.memory_space<vmem>>, vector<1x128x32xf32>
    %26 = vector.shape_cast %25 : vector<1x128x32xf32> to vector<128x32xf32>
    %c0_38 = arith.constant 0 : index
    %c0_39 = arith.constant 0 : index
    %c0_40 = arith.constant 0 : index
    %27 = vector.load %arg15[%c0_38, %c0_39, %c0_40] : memref<2x1x32xf32, #tpu.memory_space<vmem>>, vector<1x1x32xf32>
    %28 = vector.shape_cast %27 : vector<1x1x32xf32> to vector<1x32xf32>
    %cst_41 = arith.constant dense<0.000000e+00> : vector<16x128xf32>
    %29 = tpu.matmul %4, %6, %cst_41 {dimension_numbers = #tpu.dot_dimension_numbers<[1], [0], [0], [1], [0, 0, 1, 1], [], []>} : vector<16x32xf32>, vector<32x128xf32>, vector<16x128xf32> -> vector<16x128xf32>
    %30 = vector.broadcast %8 : vector<1x128xf32> to vector<16x128xf32>
    %31 = arith.addf %29, %30 : vector<16x128xf32>
    %32 = vector.extract_strided_slice %31 {offsets = [0, 0], sizes = [16, 32], strides = [1, 1]} : vector<16x128xf32> to vector<16x32xf32>
    %33 = vector.shape_cast %32 : vector<16x32xf32> to vector<2x8x32xf32>
    %34 = vector.extract_strided_slice %31 {offsets = [0, 32], sizes = [16, 32], strides = [1, 1]} : vector<16x128xf32> to vector<16x32xf32>
    %35 = vector.shape_cast %34 : vector<16x32xf32> to vector<2x8x32xf32>
    %36 = vector.extract_strided_slice %31 {offsets = [0, 64], sizes = [16, 32], strides = [1, 1]} : vector<16x128xf32> to vector<16x32xf32>
    %37 = vector.shape_cast %36 : vector<16x32xf32> to vector<2x8x32xf32>
    %38 = tpu.transpose %35, [0, 2, 1] : vector<2x8x32xf32> -> vector<2x32x8xf32>
    %39 = vector.extract_strided_slice %33 {offsets = [0, 0, 0], sizes = [2, 8, 8], strides = [1, 1, 1]} : vector<2x8x32xf32> to vector<2x8x8xf32>
    %40 = vector.extract_strided_slice %38 {offsets = [0, 0, 0], sizes = [2, 8, 8], strides = [1, 1, 1]} : vector<2x32x8xf32> to vector<2x8x8xf32>
    %41 = vector.extract_strided_slice %37 {offsets = [0, 0, 0], sizes = [2, 8, 8], strides = [1, 1, 1]} : vector<2x8x32xf32> to vector<2x8x8xf32>
    "tpu.trace_start"() <{level = 10 : i32, message = "bqd,bdk->bqk"}> : () -> ()
    %cst_42 = arith.constant dense<0.000000e+00> : vector<2x8x8xf32>
    %42 = tpu.matmul %39, %40, %cst_42 {dimension_numbers = #tpu.dot_dimension_numbers<[2], [1], [1], [2], [0, 0, 0, 1, 1, 2], [0], [0]>} : vector<2x8x8xf32>, vector<2x8x8xf32>, vector<2x8x8xf32> -> vector<2x8x8xf32>
    "tpu.trace_stop"() : () -> ()
    %cst_43 = arith.constant dense<0xFF800000> : vector<2x8xf32>
    %43 = vector.multi_reduction <maximumf>, %42, %cst_43 [2] : vector<2x8x8xf32> to vector<2x8xf32>
    %44 = vector.shape_cast %43 : vector<2x8xf32> to vector<2x8x1xf32>
    %45 = vector.broadcast %44 : vector<2x8x1xf32> to vector<2x8x8xf32>
    %46 = arith.subf %42, %45 : vector<2x8x8xf32>
    %47 = math.exp %46 : vector<2x8x8xf32>
    %cst_44 = arith.constant dense<0.000000e+00> : vector<2x8xf32>
    %48 = vector.multi_reduction <add>, %47, %cst_44 [2] : vector<2x8x8xf32> to vector<2x8xf32>
    %49 = vector.shape_cast %48 : vector<2x8xf32> to vector<2x8x1xf32>
    %50 = tpu.reciprocal %49 {approx = true} : vector<2x8x1xf32> -> vector<2x8x1xf32>
    %51 = vector.broadcast %50 : vector<2x8x1xf32> to vector<2x8x8xf32>
    %52 = arith.mulf %47, %51 : vector<2x8x8xf32>
    "tpu.trace_start"() <{level = 10 : i32, message = "bqk,bkd->bqd"}> : () -> ()
    %cst_45 = arith.constant dense<0.000000e+00> : vector<2x8x8xf32>
    %53 = tpu.matmul %52, %41, %cst_45 {dimension_numbers = #tpu.dot_dimension_numbers<[2], [1], [1], [2], [0, 0, 0, 1, 1, 2], [0], [0]>} : vector<2x8x8xf32>, vector<2x8x8xf32>, vector<2x8x8xf32> -> vector<2x8x8xf32>
    "tpu.trace_stop"() : () -> ()
    %54 = vector.shape_cast %53 : vector<2x8x8xf32> to vector<16x8xf32>
    %55 = vector.extract_strided_slice %33 {offsets = [0, 0, 8], sizes = [2, 8, 8], strides = [1, 1, 1]} : vector<2x8x32xf32> to vector<2x8x8xf32>
    %56 = vector.extract_strided_slice %38 {offsets = [0, 8, 0], sizes = [2, 8, 8], strides = [1, 1, 1]} : vector<2x32x8xf32> to vector<2x8x8xf32>
    %57 = vector.extract_strided_slice %37 {offsets = [0, 0, 8], sizes = [2, 8, 8], strides = [1, 1, 1]} : vector<2x8x32xf32> to vector<2x8x8xf32>
    "tpu.trace_start"() <{level = 10 : i32, message = "bqd,bdk->bqk"}> : () -> ()
    %cst_46 = arith.constant dense<0.000000e+00> : vector<2x8x8xf32>
    %58 = tpu.matmul %55, %56, %cst_46 {dimension_numbers = #tpu.dot_dimension_numbers<[2], [1], [1], [2], [0, 0, 0, 1, 1, 2], [0], [0]>} : vector<2x8x8xf32>, vector<2x8x8xf32>, vector<2x8x8xf32> -> vector<2x8x8xf32>
    "tpu.trace_stop"() : () -> ()
    %cst_47 = arith.constant dense<0xFF800000> : vector<2x8xf32>
    %59 = vector.multi_reduction <maximumf>, %58, %cst_47 [2] : vector<2x8x8xf32> to vector<2x8xf32>
    %60 = vector.shape_cast %59 : vector<2x8xf32> to vector<2x8x1xf32>
    %61 = vector.broadcast %60 : vector<2x8x1xf32> to vector<2x8x8xf32>
    %62 = arith.subf %58, %61 : vector<2x8x8xf32>
    %63 = math.exp %62 : vector<2x8x8xf32>
    %cst_48 = arith.constant dense<0.000000e+00> : vector<2x8xf32>
    %64 = vector.multi_reduction <add>, %63, %cst_48 [2] : vector<2x8x8xf32> to vector<2x8xf32>
    %65 = vector.shape_cast %64 : vector<2x8xf32> to vector<2x8x1xf32>
    %66 = tpu.reciprocal %65 {approx = true} : vector<2x8x1xf32> -> vector<2x8x1xf32>
    %67 = vector.broadcast %66 : vector<2x8x1xf32> to vector<2x8x8xf32>
    %68 = arith.mulf %63, %67 : vector<2x8x8xf32>
    "tpu.trace_start"() <{level = 10 : i32, message = "bqk,bkd->bqd"}> : () -> ()
    %cst_49 = arith.constant dense<0.000000e+00> : vector<2x8x8xf32>
    %69 = tpu.matmul %68, %57, %cst_49 {dimension_numbers = #tpu.dot_dimension_numbers<[2], [1], [1], [2], [0, 0, 0, 1, 1, 2], [0], [0]>} : vector<2x8x8xf32>, vector<2x8x8xf32>, vector<2x8x8xf32> -> vector<2x8x8xf32>
    "tpu.trace_stop"() : () -> ()
    %70 = vector.shape_cast %69 : vector<2x8x8xf32> to vector<16x8xf32>
    %71 = vector.extract_strided_slice %33 {offsets = [0, 0, 16], sizes = [2, 8, 8], strides = [1, 1, 1]} : vector<2x8x32xf32> to vector<2x8x8xf32>
    %72 = vector.extract_strided_slice %38 {offsets = [0, 16, 0], sizes = [2, 8, 8], strides = [1, 1, 1]} : vector<2x32x8xf32> to vector<2x8x8xf32>
    %73 = vector.extract_strided_slice %37 {offsets = [0, 0, 16], sizes = [2, 8, 8], strides = [1, 1, 1]} : vector<2x8x32xf32> to vector<2x8x8xf32>
    "tpu.trace_start"() <{level = 10 : i32, message = "bqd,bdk->bqk"}> : () -> ()
    %cst_50 = arith.constant dense<0.000000e+00> : vector<2x8x8xf32>
    %74 = tpu.matmul %71, %72, %cst_50 {dimension_numbers = #tpu.dot_dimension_numbers<[2], [1], [1], [2], [0, 0, 0, 1, 1, 2], [0], [0]>} : vector<2x8x8xf32>, vector<2x8x8xf32>, vector<2x8x8xf32> -> vector<2x8x8xf32>
    "tpu.trace_stop"() : () -> ()
    %cst_51 = arith.constant dense<0xFF800000> : vector<2x8xf32>
    %75 = vector.multi_reduction <maximumf>, %74, %cst_51 [2] : vector<2x8x8xf32> to vector<2x8xf32>
    %76 = vector.shape_cast %75 : vector<2x8xf32> to vector<2x8x1xf32>
    %77 = vector.broadcast %76 : vector<2x8x1xf32> to vector<2x8x8xf32>
    %78 = arith.subf %74, %77 : vector<2x8x8xf32>
    %79 = math.exp %78 : vector<2x8x8xf32>
    %cst_52 = arith.constant dense<0.000000e+00> : vector<2x8xf32>
    %80 = vector.multi_reduction <add>, %79, %cst_52 [2] : vector<2x8x8xf32> to vector<2x8xf32>
    %81 = vector.shape_cast %80 : vector<2x8xf32> to vector<2x8x1xf32>
    %82 = tpu.reciprocal %81 {approx = true} : vector<2x8x1xf32> -> vector<2x8x1xf32>
    %83 = vector.broadcast %82 : vector<2x8x1xf32> to vector<2x8x8xf32>
    %84 = arith.mulf %79, %83 : vector<2x8x8xf32>
    "tpu.trace_start"() <{level = 10 : i32, message = "bqk,bkd->bqd"}> : () -> ()
    %cst_53 = arith.constant dense<0.000000e+00> : vector<2x8x8xf32>
    %85 = tpu.matmul %84, %73, %cst_53 {dimension_numbers = #tpu.dot_dimension_numbers<[2], [1], [1], [2], [0, 0, 0, 1, 1, 2], [0], [0]>} : vector<2x8x8xf32>, vector<2x8x8xf32>, vector<2x8x8xf32> -> vector<2x8x8xf32>
    "tpu.trace_stop"() : () -> ()
    %86 = vector.shape_cast %85 : vector<2x8x8xf32> to vector<16x8xf32>
    %87 = vector.extract_strided_slice %33 {offsets = [0, 0, 24], sizes = [2, 8, 8], strides = [1, 1, 1]} : vector<2x8x32xf32> to vector<2x8x8xf32>
    %88 = vector.extract_strided_slice %38 {offsets = [0, 24, 0], sizes = [2, 8, 8], strides = [1, 1, 1]} : vector<2x32x8xf32> to vector<2x8x8xf32>
    %89 = vector.extract_strided_slice %37 {offsets = [0, 0, 24], sizes = [2, 8, 8], strides = [1, 1, 1]} : vector<2x8x32xf32> to vector<2x8x8xf32>
    "tpu.trace_start"() <{level = 10 : i32, message = "bqd,bdk->bqk"}> : () -> ()
    %cst_54 = arith.constant dense<0.000000e+00> : vector<2x8x8xf32>
    %90 = tpu.matmul %87, %88, %cst_54 {dimension_numbers = #tpu.dot_dimension_numbers<[2], [1], [1], [2], [0, 0, 0, 1, 1, 2], [0], [0]>} : vector<2x8x8xf32>, vector<2x8x8xf32>, vector<2x8x8xf32> -> vector<2x8x8xf32>
    "tpu.trace_stop"() : () -> ()
    %cst_55 = arith.constant dense<0xFF800000> : vector<2x8xf32>
    %91 = vector.multi_reduction <maximumf>, %90, %cst_55 [2] : vector<2x8x8xf32> to vector<2x8xf32>
    %92 = vector.shape_cast %91 : vector<2x8xf32> to vector<2x8x1xf32>
    %93 = vector.broadcast %92 : vector<2x8x1xf32> to vector<2x8x8xf32>
    %94 = arith.subf %90, %93 : vector<2x8x8xf32>
    %95 = math.exp %94 : vector<2x8x8xf32>
    %cst_56 = arith.constant dense<0.000000e+00> : vector<2x8xf32>
    %96 = vector.multi_reduction <add>, %95, %cst_56 [2] : vector<2x8x8xf32> to vector<2x8xf32>
    %97 = vector.shape_cast %96 : vector<2x8xf32> to vector<2x8x1xf32>
    %98 = tpu.reciprocal %97 {approx = true} : vector<2x8x1xf32> -> vector<2x8x1xf32>
    %99 = vector.broadcast %98 : vector<2x8x1xf32> to vector<2x8x8xf32>
    %100 = arith.mulf %95, %99 : vector<2x8x8xf32>
    "tpu.trace_start"() <{level = 10 : i32, message = "bqk,bkd->bqd"}> : () -> ()
    %cst_57 = arith.constant dense<0.000000e+00> : vector<2x8x8xf32>
    %101 = tpu.matmul %100, %89, %cst_57 {dimension_numbers = #tpu.dot_dimension_numbers<[2], [1], [1], [2], [0, 0, 0, 1, 1, 2], [0], [0]>} : vector<2x8x8xf32>, vector<2x8x8xf32>, vector<2x8x8xf32> -> vector<2x8x8xf32>
    "tpu.trace_stop"() : () -> ()
    %102 = vector.shape_cast %101 : vector<2x8x8xf32> to vector<16x8xf32>
    %103 = tpu.concatenate %54, %70, %86, %102 in 1 : vector<16x8xf32>, vector<16x8xf32>, vector<16x8xf32>, vector<16x8xf32> -> vector<16x32xf32>
    %cst_58 = arith.constant dense<0.000000e+00> : vector<16x32xf32>
    %104 = tpu.matmul %103, %10, %cst_58 {dimension_numbers = #tpu.dot_dimension_numbers<[1], [0], [0], [1], [0, 0, 1, 1], [], []>} : vector<16x32xf32>, vector<32x32xf32>, vector<16x32xf32> -> vector<16x32xf32>
    %105 = vector.broadcast %12 : vector<1x32xf32> to vector<16x32xf32>
    %106 = arith.addf %104, %105 : vector<16x32xf32>
    %107 = arith.addf %4, %106 : vector<16x32xf32>
    %cst_59 = arith.constant dense<0.000000e+00> : vector<16xf32>
    %108 = vector.multi_reduction <add>, %107, %cst_59 [1] : vector<16x32xf32> to vector<16xf32>
    %109 = vector.shape_cast %108 : vector<16xf32> to vector<16x1xf32>
    %cst_60 = arith.constant 3.200000e+01 : f32
    %110 = vector.broadcast %cst_60 : f32 to vector<16x1xf32>
    %111 = arith.divf %109, %110 : vector<16x1xf32>
    %112 = arith.mulf %107, %107 : vector<16x32xf32>
    %cst_61 = arith.constant dense<0.000000e+00> : vector<16xf32>
    %113 = vector.multi_reduction <add>, %112, %cst_61 [1] : vector<16x32xf32> to vector<16xf32>
    %114 = vector.shape_cast %113 : vector<16xf32> to vector<16x1xf32>
    %cst_62 = arith.constant 3.200000e+01 : f32
    %115 = vector.broadcast %cst_62 : f32 to vector<16x1xf32>
    %116 = arith.divf %114, %115 : vector<16x1xf32>
    %117 = arith.mulf %111, %111 : vector<16x1xf32>
    %118 = arith.subf %116, %117 : vector<16x1xf32>
    %119 = vector.broadcast %111 : vector<16x1xf32> to vector<16x32xf32>
    %120 = arith.subf %107, %119 : vector<16x32xf32>
    %cst_63 = arith.constant 9.99999974E-6 : f32
    %121 = vector.broadcast %cst_63 : f32 to vector<16x1xf32>
    %122 = arith.addf %118, %121 : vector<16x1xf32>
    %123 = math.rsqrt %122 : vector<16x1xf32>
    %124 = vector.broadcast %123 : vector<16x1xf32> to vector<16x32xf32>
    %125 = arith.mulf %120, %124 : vector<16x32xf32>
    %126 = vector.broadcast %14 : vector<1x32xf32> to vector<16x32xf32>
    %127 = arith.mulf %125, %126 : vector<16x32xf32>
    %128 = vector.broadcast %16 : vector<1x32xf32> to vector<16x32xf32>
    %129 = arith.addf %127, %128 : vector<16x32xf32>
    %cst_64 = arith.constant dense<0.000000e+00> : vector<16x128xf32>
    %130 = tpu.matmul %129, %22, %cst_64 {dimension_numbers = #tpu.dot_dimension_numbers<[1], [0], [0], [1], [0, 0, 1, 1], [], []>} : vector<16x32xf32>, vector<32x128xf32>, vector<16x128xf32> -> vector<16x128xf32>
    %131 = vector.broadcast %24 : vector<1x128xf32> to vector<16x128xf32>
    %132 = arith.addf %130, %131 : vector<16x128xf32>
    %cst_65 = arith.constant 0.000000e+00 : f32
    %133 = vector.broadcast %cst_65 : f32 to vector<16x128xf32>
    %134 = arith.maximumf %132, %133 : vector<16x128xf32>
    %cst_66 = arith.constant dense<0.000000e+00> : vector<16x32xf32>
    %135 = tpu.matmul %134, %26, %cst_66 {dimension_numbers = #tpu.dot_dimension_numbers<[1], [0], [0], [1], [0, 0, 1, 1], [], []>} : vector<16x128xf32>, vector<128x32xf32>, vector<16x32xf32> -> vector<16x32xf32>
    %136 = vector.broadcast %28 : vector<1x32xf32> to vector<16x32xf32>
    %137 = arith.addf %135, %136 : vector<16x32xf32>
    %138 = arith.addf %129, %137 : vector<16x32xf32>
    %cst_67 = arith.constant dense<0.000000e+00> : vector<16xf32>
    %139 = vector.multi_reduction <add>, %138, %cst_67 [1] : vector<16x32xf32> to vector<16xf32>
    %140 = vector.shape_cast %139 : vector<16xf32> to vector<16x1xf32>
    %cst_68 = arith.constant 3.200000e+01 : f32
    %141 = vector.broadcast %cst_68 : f32 to vector<16x1xf32>
    %142 = arith.divf %140, %141 : vector<16x1xf32>
    %143 = arith.mulf %138, %138 : vector<16x32xf32>
    %cst_69 = arith.constant dense<0.000000e+00> : vector<16xf32>
    %144 = vector.multi_reduction <add>, %143, %cst_69 [1] : vector<16x32xf32> to vector<16xf32>
    %145 = vector.shape_cast %144 : vector<16xf32> to vector<16x1xf32>
    %cst_70 = arith.constant 3.200000e+01 : f32
    %146 = vector.broadcast %cst_70 : f32 to vector<16x1xf32>
    %147 = arith.divf %145, %146 : vector<16x1xf32>
    %148 = arith.mulf %142, %142 : vector<16x1xf32>
    %149 = arith.subf %147, %148 : vector<16x1xf32>
    %150 = vector.broadcast %142 : vector<16x1xf32> to vector<16x32xf32>
    %151 = arith.subf %138, %150 : vector<16x32xf32>
    %cst_71 = arith.constant 9.99999974E-6 : f32
    %152 = vector.broadcast %cst_71 : f32 to vector<16x1xf32>
    %153 = arith.addf %149, %152 : vector<16x1xf32>
    %154 = math.rsqrt %153 : vector<16x1xf32>
    %155 = vector.broadcast %154 : vector<16x1xf32> to vector<16x32xf32>
    %156 = arith.mulf %151, %155 : vector<16x32xf32>
    %157 = vector.broadcast %18 : vector<1x32xf32> to vector<16x32xf32>
    %158 = arith.mulf %156, %157 : vector<16x32xf32>
    %159 = vector.broadcast %20 : vector<1x32xf32> to vector<16x32xf32>
    %160 = arith.addf %158, %159 : vector<16x32xf32>
    %c1 = arith.constant 1 : index
    %c0_72 = arith.constant 0 : index
    %c0_73 = arith.constant 0 : index
    %161 = vector.load %arg4[%c1, %c0_72, %c0_73] : memref<2x32x128xf32, #tpu.memory_space<vmem>>, vector<1x32x128xf32>
    %162 = vector.shape_cast %161 : vector<1x32x128xf32> to vector<32x128xf32>
    %c1_74 = arith.constant 1 : index
    %c0_75 = arith.constant 0 : index
    %c0_76 = arith.constant 0 : index
    %163 = vector.load %arg5[%c1_74, %c0_75, %c0_76] : memref<2x1x128xf32, #tpu.memory_space<vmem>>, vector<1x1x128xf32>
    %164 = vector.shape_cast %163 : vector<1x1x128xf32> to vector<1x128xf32>
    %c1_77 = arith.constant 1 : index
    %c0_78 = arith.constant 0 : index
    %c0_79 = arith.constant 0 : index
    %165 = vector.load %arg6[%c1_77, %c0_78, %c0_79] : memref<2x32x32xf32, #tpu.memory_space<vmem>>, vector<1x32x32xf32>
    %166 = vector.shape_cast %165 : vector<1x32x32xf32> to vector<32x32xf32>
    %c1_80 = arith.constant 1 : index
    %c0_81 = arith.constant 0 : index
    %c0_82 = arith.constant 0 : index
    %167 = vector.load %arg7[%c1_80, %c0_81, %c0_82] : memref<2x1x32xf32, #tpu.memory_space<vmem>>, vector<1x1x32xf32>
    %168 = vector.shape_cast %167 : vector<1x1x32xf32> to vector<1x32xf32>
    %c1_83 = arith.constant 1 : index
    %c0_84 = arith.constant 0 : index
    %c0_85 = arith.constant 0 : index
    %169 = vector.load %arg8[%c1_83, %c0_84, %c0_85] : memref<2x1x32xf32, #tpu.memory_space<vmem>>, vector<1x1x32xf32>
    %170 = vector.shape_cast %169 : vector<1x1x32xf32> to vector<1x32xf32>
    %c1_86 = arith.constant 1 : index
    %c0_87 = arith.constant 0 : index
    %c0_88 = arith.constant 0 : index
    %171 = vector.load %arg9[%c1_86, %c0_87, %c0_88] : memref<2x1x32xf32, #tpu.memory_space<vmem>>, vector<1x1x32xf32>
    %172 = vector.shape_cast %171 : vector<1x1x32xf32> to vector<1x32xf32>
    %c1_89 = arith.constant 1 : index
    %c0_90 = arith.constant 0 : index
    %c0_91 = arith.constant 0 : index
    %173 = vector.load %arg10[%c1_89, %c0_90, %c0_91] : memref<2x1x32xf32, #tpu.memory_space<vmem>>, vector<1x1x32xf32>
    %174 = vector.shape_cast %173 : vector<1x1x32xf32> to vector<1x32xf32>
    %c1_92 = arith.constant 1 : index
    %c0_93 = arith.constant 0 : index
    %c0_94 = arith.constant 0 : index
    %175 = vector.load %arg11[%c1_92, %c0_93, %c0_94] : memref<2x1x32xf32, #tpu.memory_space<vmem>>, vector<1x1x32xf32>
    %176 = vector.shape_cast %175 : vector<1x1x32xf32> to vector<1x32xf32>
    %c1_95 = arith.constant 1 : index
    %c0_96 = arith.constant 0 : index
    %c0_97 = arith.constant 0 : index
    %177 = vector.load %arg12[%c1_95, %c0_96, %c0_97] : memref<2x32x128xf32, #tpu.memory_space<vmem>>, vector<1x32x128xf32>
    %178 = vector.shape_cast %177 : vector<1x32x128xf32> to vector<32x128xf32>
    %c1_98 = arith.constant 1 : index
    %c0_99 = arith.constant 0 : index
    %c0_100 = arith.constant 0 : index
    %179 = vector.load %arg13[%c1_98, %c0_99, %c0_100] : memref<2x1x128xf32, #tpu.memory_space<vmem>>, vector<1x1x128xf32>
    %180 = vector.shape_cast %179 : vector<1x1x128xf32> to vector<1x128xf32>
    %c1_101 = arith.constant 1 : index
    %c0_102 = arith.constant 0 : index
    %c0_103 = arith.constant 0 : index
    %181 = vector.load %arg14[%c1_101, %c0_102, %c0_103] : memref<2x128x32xf32, #tpu.memory_space<vmem>>, vector<1x128x32xf32>
    %182 = vector.shape_cast %181 : vector<1x128x32xf32> to vector<128x32xf32>
    %c1_104 = arith.constant 1 : index
    %c0_105 = arith.constant 0 : index
    %c0_106 = arith.constant 0 : index
    %183 = vector.load %arg15[%c1_104, %c0_105, %c0_106] : memref<2x1x32xf32, #tpu.memory_space<vmem>>, vector<1x1x32xf32>
    %184 = vector.shape_cast %183 : vector<1x1x32xf32> to vector<1x32xf32>
    %cst_107 = arith.constant dense<0.000000e+00> : vector<16x128xf32>
    %185 = tpu.matmul %160, %162, %cst_107 {dimension_numbers = #tpu.dot_dimension_numbers<[1], [0], [0], [1], [0, 0, 1, 1], [], []>} : vector<16x32xf32>, vector<32x128xf32>, vector<16x128xf32> -> vector<16x128xf32>
    %186 = vector.broadcast %164 : vector<1x128xf32> to vector<16x128xf32>
    %187 = arith.addf %185, %186 : vector<16x128xf32>
    %188 = vector.extract_strided_slice %187 {offsets = [0, 0], sizes = [16, 32], strides = [1, 1]} : vector<16x128xf32> to vector<16x32xf32>
    %189 = vector.shape_cast %188 : vector<16x32xf32> to vector<2x8x32xf32>
    %190 = vector.extract_strided_slice %187 {offsets = [0, 32], sizes = [16, 32], strides = [1, 1]} : vector<16x128xf32> to vector<16x32xf32>
    %191 = vector.shape_cast %190 : vector<16x32xf32> to vector<2x8x32xf32>
    %192 = vector.extract_strided_slice %187 {offsets = [0, 64], sizes = [16, 32], strides = [1, 1]} : vector<16x128xf32> to vector<16x32xf32>
    %193 = vector.shape_cast %192 : vector<16x32xf32> to vector<2x8x32xf32>
    %194 = tpu.transpose %191, [0, 2, 1] : vector<2x8x32xf32> -> vector<2x32x8xf32>
    %195 = vector.extract_strided_slice %189 {offsets = [0, 0, 0], sizes = [2, 8, 8], strides = [1, 1, 1]} : vector<2x8x32xf32> to vector<2x8x8xf32>
    %196 = vector.extract_strided_slice %194 {offsets = [0, 0, 0], sizes = [2, 8, 8], strides = [1, 1, 1]} : vector<2x32x8xf32> to vector<2x8x8xf32>
    %197 = vector.extract_strided_slice %193 {offsets = [0, 0, 0], sizes = [2, 8, 8], strides = [1, 1, 1]} : vector<2x8x32xf32> to vector<2x8x8xf32>
    "tpu.trace_start"() <{level = 10 : i32, message = "bqd,bdk->bqk"}> : () -> ()
    %cst_108 = arith.constant dense<0.000000e+00> : vector<2x8x8xf32>
    %198 = tpu.matmul %195, %196, %cst_108 {dimension_numbers = #tpu.dot_dimension_numbers<[2], [1], [1], [2], [0, 0, 0, 1, 1, 2], [0], [0]>} : vector<2x8x8xf32>, vector<2x8x8xf32>, vector<2x8x8xf32> -> vector<2x8x8xf32>
    "tpu.trace_stop"() : () -> ()
    %cst_109 = arith.constant dense<0xFF800000> : vector<2x8xf32>
    %199 = vector.multi_reduction <maximumf>, %198, %cst_109 [2] : vector<2x8x8xf32> to vector<2x8xf32>
    %200 = vector.shape_cast %199 : vector<2x8xf32> to vector<2x8x1xf32>
    %201 = vector.broadcast %200 : vector<2x8x1xf32> to vector<2x8x8xf32>
    %202 = arith.subf %198, %201 : vector<2x8x8xf32>
    %203 = math.exp %202 : vector<2x8x8xf32>
    %cst_110 = arith.constant dense<0.000000e+00> : vector<2x8xf32>
    %204 = vector.multi_reduction <add>, %203, %cst_110 [2] : vector<2x8x8xf32> to vector<2x8xf32>
    %205 = vector.shape_cast %204 : vector<2x8xf32> to vector<2x8x1xf32>
    %206 = tpu.reciprocal %205 {approx = true} : vector<2x8x1xf32> -> vector<2x8x1xf32>
    %207 = vector.broadcast %206 : vector<2x8x1xf32> to vector<2x8x8xf32>
    %208 = arith.mulf %203, %207 : vector<2x8x8xf32>
    "tpu.trace_start"() <{level = 10 : i32, message = "bqk,bkd->bqd"}> : () -> ()
    %cst_111 = arith.constant dense<0.000000e+00> : vector<2x8x8xf32>
    %209 = tpu.matmul %208, %197, %cst_111 {dimension_numbers = #tpu.dot_dimension_numbers<[2], [1], [1], [2], [0, 0, 0, 1, 1, 2], [0], [0]>} : vector<2x8x8xf32>, vector<2x8x8xf32>, vector<2x8x8xf32> -> vector<2x8x8xf32>
    "tpu.trace_stop"() : () -> ()
    %210 = vector.shape_cast %209 : vector<2x8x8xf32> to vector<16x8xf32>
    %211 = vector.extract_strided_slice %189 {offsets = [0, 0, 8], sizes = [2, 8, 8], strides = [1, 1, 1]} : vector<2x8x32xf32> to vector<2x8x8xf32>
    %212 = vector.extract_strided_slice %194 {offsets = [0, 8, 0], sizes = [2, 8, 8], strides = [1, 1, 1]} : vector<2x32x8xf32> to vector<2x8x8xf32>
    %213 = vector.extract_strided_slice %193 {offsets = [0, 0, 8], sizes = [2, 8, 8], strides = [1, 1, 1]} : vector<2x8x32xf32> to vector<2x8x8xf32>
    "tpu.trace_start"() <{level = 10 : i32, message = "bqd,bdk->bqk"}> : () -> ()
    %cst_112 = arith.constant dense<0.000000e+00> : vector<2x8x8xf32>
    %214 = tpu.matmul %211, %212, %cst_112 {dimension_numbers = #tpu.dot_dimension_numbers<[2], [1], [1], [2], [0, 0, 0, 1, 1, 2], [0], [0]>} : vector<2x8x8xf32>, vector<2x8x8xf32>, vector<2x8x8xf32> -> vector<2x8x8xf32>
    "tpu.trace_stop"() : () -> ()
    %cst_113 = arith.constant dense<0xFF800000> : vector<2x8xf32>
    %215 = vector.multi_reduction <maximumf>, %214, %cst_113 [2] : vector<2x8x8xf32> to vector<2x8xf32>
    %216 = vector.shape_cast %215 : vector<2x8xf32> to vector<2x8x1xf32>
    %217 = vector.broadcast %216 : vector<2x8x1xf32> to vector<2x8x8xf32>
    %218 = arith.subf %214, %217 : vector<2x8x8xf32>
    %219 = math.exp %218 : vector<2x8x8xf32>
    %cst_114 = arith.constant dense<0.000000e+00> : vector<2x8xf32>
    %220 = vector.multi_reduction <add>, %219, %cst_114 [2] : vector<2x8x8xf32> to vector<2x8xf32>
    %221 = vector.shape_cast %220 : vector<2x8xf32> to vector<2x8x1xf32>
    %222 = tpu.reciprocal %221 {approx = true} : vector<2x8x1xf32> -> vector<2x8x1xf32>
    %223 = vector.broadcast %222 : vector<2x8x1xf32> to vector<2x8x8xf32>
    %224 = arith.mulf %219, %223 : vector<2x8x8xf32>
    "tpu.trace_start"() <{level = 10 : i32, message = "bqk,bkd->bqd"}> : () -> ()
    %cst_115 = arith.constant dense<0.000000e+00> : vector<2x8x8xf32>
    %225 = tpu.matmul %224, %213, %cst_115 {dimension_numbers = #tpu.dot_dimension_numbers<[2], [1], [1], [2], [0, 0, 0, 1, 1, 2], [0], [0]>} : vector<2x8x8xf32>, vector<2x8x8xf32>, vector<2x8x8xf32> -> vector<2x8x8xf32>
    "tpu.trace_stop"() : () -> ()
    %226 = vector.shape_cast %225 : vector<2x8x8xf32> to vector<16x8xf32>
    %227 = vector.extract_strided_slice %189 {offsets = [0, 0, 16], sizes = [2, 8, 8], strides = [1, 1, 1]} : vector<2x8x32xf32> to vector<2x8x8xf32>
    %228 = vector.extract_strided_slice %194 {offsets = [0, 16, 0], sizes = [2, 8, 8], strides = [1, 1, 1]} : vector<2x32x8xf32> to vector<2x8x8xf32>
    %229 = vector.extract_strided_slice %193 {offsets = [0, 0, 16], sizes = [2, 8, 8], strides = [1, 1, 1]} : vector<2x8x32xf32> to vector<2x8x8xf32>
    "tpu.trace_start"() <{level = 10 : i32, message = "bqd,bdk->bqk"}> : () -> ()
    %cst_116 = arith.constant dense<0.000000e+00> : vector<2x8x8xf32>
    %230 = tpu.matmul %227, %228, %cst_116 {dimension_numbers = #tpu.dot_dimension_numbers<[2], [1], [1], [2], [0, 0, 0, 1, 1, 2], [0], [0]>} : vector<2x8x8xf32>, vector<2x8x8xf32>, vector<2x8x8xf32> -> vector<2x8x8xf32>
    "tpu.trace_stop"() : () -> ()
    %cst_117 = arith.constant dense<0xFF800000> : vector<2x8xf32>
    %231 = vector.multi_reduction <maximumf>, %230, %cst_117 [2] : vector<2x8x8xf32> to vector<2x8xf32>
    %232 = vector.shape_cast %231 : vector<2x8xf32> to vector<2x8x1xf32>
    %233 = vector.broadcast %232 : vector<2x8x1xf32> to vector<2x8x8xf32>
    %234 = arith.subf %230, %233 : vector<2x8x8xf32>
    %235 = math.exp %234 : vector<2x8x8xf32>
    %cst_118 = arith.constant dense<0.000000e+00> : vector<2x8xf32>
    %236 = vector.multi_reduction <add>, %235, %cst_118 [2] : vector<2x8x8xf32> to vector<2x8xf32>
    %237 = vector.shape_cast %236 : vector<2x8xf32> to vector<2x8x1xf32>
    %238 = tpu.reciprocal %237 {approx = true} : vector<2x8x1xf32> -> vector<2x8x1xf32>
    %239 = vector.broadcast %238 : vector<2x8x1xf32> to vector<2x8x8xf32>
    %240 = arith.mulf %235, %239 : vector<2x8x8xf32>
    "tpu.trace_start"() <{level = 10 : i32, message = "bqk,bkd->bqd"}> : () -> ()
    %cst_119 = arith.constant dense<0.000000e+00> : vector<2x8x8xf32>
    %241 = tpu.matmul %240, %229, %cst_119 {dimension_numbers = #tpu.dot_dimension_numbers<[2], [1], [1], [2], [0, 0, 0, 1, 1, 2], [0], [0]>} : vector<2x8x8xf32>, vector<2x8x8xf32>, vector<2x8x8xf32> -> vector<2x8x8xf32>
    "tpu.trace_stop"() : () -> ()
    %242 = vector.shape_cast %241 : vector<2x8x8xf32> to vector<16x8xf32>
    %243 = vector.extract_strided_slice %189 {offsets = [0, 0, 24], sizes = [2, 8, 8], strides = [1, 1, 1]} : vector<2x8x32xf32> to vector<2x8x8xf32>
    %244 = vector.extract_strided_slice %194 {offsets = [0, 24, 0], sizes = [2, 8, 8], strides = [1, 1, 1]} : vector<2x32x8xf32> to vector<2x8x8xf32>
    %245 = vector.extract_strided_slice %193 {offsets = [0, 0, 24], sizes = [2, 8, 8], strides = [1, 1, 1]} : vector<2x8x32xf32> to vector<2x8x8xf32>
    "tpu.trace_start"() <{level = 10 : i32, message = "bqd,bdk->bqk"}> : () -> ()
    %cst_120 = arith.constant dense<0.000000e+00> : vector<2x8x8xf32>
    %246 = tpu.matmul %243, %244, %cst_120 {dimension_numbers = #tpu.dot_dimension_numbers<[2], [1], [1], [2], [0, 0, 0, 1, 1, 2], [0], [0]>} : vector<2x8x8xf32>, vector<2x8x8xf32>, vector<2x8x8xf32> -> vector<2x8x8xf32>
    "tpu.trace_stop"() : () -> ()
    %cst_121 = arith.constant dense<0xFF800000> : vector<2x8xf32>
    %247 = vector.multi_reduction <maximumf>, %246, %cst_121 [2] : vector<2x8x8xf32> to vector<2x8xf32>
    %248 = vector.shape_cast %247 : vector<2x8xf32> to vector<2x8x1xf32>
    %249 = vector.broadcast %248 : vector<2x8x1xf32> to vector<2x8x8xf32>
    %250 = arith.subf %246, %249 : vector<2x8x8xf32>
    %251 = math.exp %250 : vector<2x8x8xf32>
    %cst_122 = arith.constant dense<0.000000e+00> : vector<2x8xf32>
    %252 = vector.multi_reduction <add>, %251, %cst_122 [2] : vector<2x8x8xf32> to vector<2x8xf32>
    %253 = vector.shape_cast %252 : vector<2x8xf32> to vector<2x8x1xf32>
    %254 = tpu.reciprocal %253 {approx = true} : vector<2x8x1xf32> -> vector<2x8x1xf32>
    %255 = vector.broadcast %254 : vector<2x8x1xf32> to vector<2x8x8xf32>
    %256 = arith.mulf %251, %255 : vector<2x8x8xf32>
    "tpu.trace_start"() <{level = 10 : i32, message = "bqk,bkd->bqd"}> : () -> ()
    %cst_123 = arith.constant dense<0.000000e+00> : vector<2x8x8xf32>
    %257 = tpu.matmul %256, %245, %cst_123 {dimension_numbers = #tpu.dot_dimension_numbers<[2], [1], [1], [2], [0, 0, 0, 1, 1, 2], [0], [0]>} : vector<2x8x8xf32>, vector<2x8x8xf32>, vector<2x8x8xf32> -> vector<2x8x8xf32>
    "tpu.trace_stop"() : () -> ()
    %258 = vector.shape_cast %257 : vector<2x8x8xf32> to vector<16x8xf32>
    %259 = tpu.concatenate %210, %226, %242, %258 in 1 : vector<16x8xf32>, vector<16x8xf32>, vector<16x8xf32>, vector<16x8xf32> -> vector<16x32xf32>
    %cst_124 = arith.constant dense<0.000000e+00> : vector<16x32xf32>
    %260 = tpu.matmul %259, %166, %cst_124 {dimension_numbers = #tpu.dot_dimension_numbers<[1], [0], [0], [1], [0, 0, 1, 1], [], []>} : vector<16x32xf32>, vector<32x32xf32>, vector<16x32xf32> -> vector<16x32xf32>
    %261 = vector.broadcast %168 : vector<1x32xf32> to vector<16x32xf32>
    %262 = arith.addf %260, %261 : vector<16x32xf32>
    %263 = arith.addf %160, %262 : vector<16x32xf32>
    %cst_125 = arith.constant dense<0.000000e+00> : vector<16xf32>
    %264 = vector.multi_reduction <add>, %263, %cst_125 [1] : vector<16x32xf32> to vector<16xf32>
    %265 = vector.shape_cast %264 : vector<16xf32> to vector<16x1xf32>
    %cst_126 = arith.constant 3.200000e+01 : f32
    %266 = vector.broadcast %cst_126 : f32 to vector<16x1xf32>
    %267 = arith.divf %265, %266 : vector<16x1xf32>
    %268 = arith.mulf %263, %263 : vector<16x32xf32>
    %cst_127 = arith.constant dense<0.000000e+00> : vector<16xf32>
    %269 = vector.multi_reduction <add>, %268, %cst_127 [1] : vector<16x32xf32> to vector<16xf32>
    %270 = vector.shape_cast %269 : vector<16xf32> to vector<16x1xf32>
    %cst_128 = arith.constant 3.200000e+01 : f32
    %271 = vector.broadcast %cst_128 : f32 to vector<16x1xf32>
    %272 = arith.divf %270, %271 : vector<16x1xf32>
    %273 = arith.mulf %267, %267 : vector<16x1xf32>
    %274 = arith.subf %272, %273 : vector<16x1xf32>
    %275 = vector.broadcast %267 : vector<16x1xf32> to vector<16x32xf32>
    %276 = arith.subf %263, %275 : vector<16x32xf32>
    %cst_129 = arith.constant 9.99999974E-6 : f32
    %277 = vector.broadcast %cst_129 : f32 to vector<16x1xf32>
    %278 = arith.addf %274, %277 : vector<16x1xf32>
    %279 = math.rsqrt %278 : vector<16x1xf32>
    %280 = vector.broadcast %279 : vector<16x1xf32> to vector<16x32xf32>
    %281 = arith.mulf %276, %280 : vector<16x32xf32>
    %282 = vector.broadcast %170 : vector<1x32xf32> to vector<16x32xf32>
    %283 = arith.mulf %281, %282 : vector<16x32xf32>
    %284 = vector.broadcast %172 : vector<1x32xf32> to vector<16x32xf32>
    %285 = arith.addf %283, %284 : vector<16x32xf32>
    %cst_130 = arith.constant dense<0.000000e+00> : vector<16x128xf32>
    %286 = tpu.matmul %285, %178, %cst_130 {dimension_numbers = #tpu.dot_dimension_numbers<[1], [0], [0], [1], [0, 0, 1, 1], [], []>} : vector<16x32xf32>, vector<32x128xf32>, vector<16x128xf32> -> vector<16x128xf32>
    %287 = vector.broadcast %180 : vector<1x128xf32> to vector<16x128xf32>
    %288 = arith.addf %286, %287 : vector<16x128xf32>
    %cst_131 = arith.constant 0.000000e+00 : f32
    %289 = vector.broadcast %cst_131 : f32 to vector<16x128xf32>
    %290 = arith.maximumf %288, %289 : vector<16x128xf32>
    %cst_132 = arith.constant dense<0.000000e+00> : vector<16x32xf32>
    %291 = tpu.matmul %290, %182, %cst_132 {dimension_numbers = #tpu.dot_dimension_numbers<[1], [0], [0], [1], [0, 0, 1, 1], [], []>} : vector<16x128xf32>, vector<128x32xf32>, vector<16x32xf32> -> vector<16x32xf32>
    %292 = vector.broadcast %184 : vector<1x32xf32> to vector<16x32xf32>
    %293 = arith.addf %291, %292 : vector<16x32xf32>
    %294 = arith.addf %285, %293 : vector<16x32xf32>
    %cst_133 = arith.constant dense<0.000000e+00> : vector<16xf32>
    %295 = vector.multi_reduction <add>, %294, %cst_133 [1] : vector<16x32xf32> to vector<16xf32>
    %296 = vector.shape_cast %295 : vector<16xf32> to vector<16x1xf32>
    %cst_134 = arith.constant 3.200000e+01 : f32
    %297 = vector.broadcast %cst_134 : f32 to vector<16x1xf32>
    %298 = arith.divf %296, %297 : vector<16x1xf32>
    %299 = arith.mulf %294, %294 : vector<16x32xf32>
    %cst_135 = arith.constant dense<0.000000e+00> : vector<16xf32>
    %300 = vector.multi_reduction <add>, %299, %cst_135 [1] : vector<16x32xf32> to vector<16xf32>
    %301 = vector.shape_cast %300 : vector<16xf32> to vector<16x1xf32>
    %cst_136 = arith.constant 3.200000e+01 : f32
    %302 = vector.broadcast %cst_136 : f32 to vector<16x1xf32>
    %303 = arith.divf %301, %302 : vector<16x1xf32>
    %304 = arith.mulf %298, %298 : vector<16x1xf32>
    %305 = arith.subf %303, %304 : vector<16x1xf32>
    %306 = vector.broadcast %298 : vector<16x1xf32> to vector<16x32xf32>
    %307 = arith.subf %294, %306 : vector<16x32xf32>
    %cst_137 = arith.constant 9.99999974E-6 : f32
    %308 = vector.broadcast %cst_137 : f32 to vector<16x1xf32>
    %309 = arith.addf %305, %308 : vector<16x1xf32>
    %310 = math.rsqrt %309 : vector<16x1xf32>
    %311 = vector.broadcast %310 : vector<16x1xf32> to vector<16x32xf32>
    %312 = arith.mulf %307, %311 : vector<16x32xf32>
    %313 = vector.broadcast %174 : vector<1x32xf32> to vector<16x32xf32>
    %314 = arith.mulf %312, %313 : vector<16x32xf32>
    %315 = vector.broadcast %176 : vector<1x32xf32> to vector<16x32xf32>
    %316 = arith.addf %314, %315 : vector<16x32xf32>
    %c0_138 = arith.constant 0 : index
    %c0_139 = arith.constant 0 : index
    %317 = vector.load %arg2[%c0_138, %c0_139] : memref<2x16xf32, #tpu.memory_space<vmem>>, vector<2x16xf32>
    %cst_140 = arith.constant dense<0.000000e+00> : vector<2x32xf32>
    %318 = tpu.matmul %317, %316, %cst_140 {dimension_numbers = #tpu.dot_dimension_numbers<[1], [0], [0], [1], [0, 0, 1, 1], [], []>} : vector<2x16xf32>, vector<16x32xf32>, vector<2x32xf32> -> vector<2x32xf32>
    %c0_141 = arith.constant 0 : index
    %c0_142 = arith.constant 0 : index
    %319 = vector.load %arg16[%c0_141, %c0_142] : memref<32x128xf32, #tpu.memory_space<vmem>>, vector<32x128xf32>
    %cst_143 = arith.constant dense<0.000000e+00> : vector<2x128xf32>
    %320 = tpu.matmul %318, %319, %cst_143 {dimension_numbers = #tpu.dot_dimension_numbers<[1], [0], [0], [1], [0, 0, 1, 1], [], []>} : vector<2x32xf32>, vector<32x128xf32>, vector<2x128xf32> -> vector<2x128xf32>
    %c0_144 = arith.constant 0 : index
    %c0_145 = arith.constant 0 : index
    %321 = vector.load %arg17[%c0_144, %c0_145] : memref<1x128xf32, #tpu.memory_space<vmem>>, vector<1x128xf32>
    %322 = vector.broadcast %321 : vector<1x128xf32> to vector<2x128xf32>
    %323 = arith.addf %320, %322 : vector<2x128xf32>
    %cst_146 = arith.constant 0.000000e+00 : f32
    %324 = vector.broadcast %cst_146 : f32 to vector<2x128xf32>
    %325 = arith.maximumf %323, %324 : vector<2x128xf32>
    %c0_147 = arith.constant 0 : index
    %c0_148 = arith.constant 0 : index
    %326 = vector.load %arg18[%c0_147, %c0_148] : memref<128x128xf32, #tpu.memory_space<vmem>>, vector<128x128xf32>
    %cst_149 = arith.constant dense<0.000000e+00> : vector<2x128xf32>
    %327 = tpu.matmul %325, %326, %cst_149 {dimension_numbers = #tpu.dot_dimension_numbers<[1], [0], [0], [1], [0, 0, 1, 1], [], []>} : vector<2x128xf32>, vector<128x128xf32>, vector<2x128xf32> -> vector<2x128xf32>
    %c0_150 = arith.constant 0 : index
    %c0_151 = arith.constant 0 : index
    %328 = vector.load %arg19[%c0_150, %c0_151] : memref<1x128xf32, #tpu.memory_space<vmem>>, vector<1x128xf32>
    %329 = vector.broadcast %328 : vector<1x128xf32> to vector<2x128xf32>
    %330 = arith.addf %327, %329 : vector<2x128xf32>
    %c0_152 = arith.constant 0 : index
    %c0_153 = arith.constant 0 : index
    %331 = vector.load %arg20[%c0_152, %c0_153] : memref<2x128xf32, #tpu.memory_space<vmem>>, vector<2x128xf32>
    tpu.vector_store %arg20[%c0_152, %c0_153], %330 {strides = array<i32>} : memref<2x128xf32, #tpu.memory_space<vmem>>, vector<2x128xf32>,
    return
  }
}

</mosaic_0001>

<llo_original>
// kernel: tpu_custom_call.1
$region0: #{tpu_custom_call.1}
  #allocation0 [shape = 'u32[]', space=smem, size = 0x4, offset = 0x4, fixed_abs, tag = 'smem constant byte address 0x4 - core index']
  #allocation1 [shape = 'u32[72,128]{1,0:T(1,128)}', space=vmem, size = 0x9000, scoped, tag = 'internal scratch']
  %s0 = inlined_call_operand.vmem [shape: f32[16,128], index: 0, kind: input, shape index: {}]
  %s1 = inlined_call_operand.vmem [shape: f32[16,32], index: 1, kind: input, shape index: {}]
  %s2 = inlined_call_operand.vmem [shape: f32[2,16], index: 2, kind: input, shape index: {}]
  %s3 = inlined_call_operand.vmem [shape: f32[128,32], index: 3, kind: input, shape index: {}]
  %s4 = inlined_call_operand.vmem [shape: f32[2,32,128], index: 4, kind: input, shape index: {}]
  %s5 = inlined_call_operand.vmem [shape: f32[2,1,128], index: 5, kind: input, shape index: {}]
  %s6 = inlined_call_operand.vmem [shape: f32[2,32,32], index: 6, kind: input, shape index: {}]
  %s7 = inlined_call_operand.vmem [shape: f32[2,1,32], index: 7, kind: input, shape index: {}]
  %s8 = inlined_call_operand.vmem [shape: f32[2,1,32], index: 8, kind: input, shape index: {}]
  %s9 = inlined_call_operand.vmem [shape: f32[2,1,32], index: 9, kind: input, shape index: {}]
  %s10 = inlined_call_operand.vmem [shape: f32[2,1,32], index: 10, kind: input, shape index: {}]
  %s11 = inlined_call_operand.vmem [shape: f32[2,1,32], index: 11, kind: input, shape index: {}]
  %s12 = inlined_call_operand.vmem [shape: f32[2,32,128], index: 12, kind: input, shape index: {}]
  %s13 = inlined_call_operand.vmem [shape: f32[2,1,128], index: 13, kind: input, shape index: {}]
  %s14 = inlined_call_operand.vmem [shape: f32[2,128,32], index: 14, kind: input, shape index: {}]
  %s15 = inlined_call_operand.vmem [shape: f32[2,1,32], index: 15, kind: input, shape index: {}]
  %s16 = inlined_call_operand.vmem [shape: f32[32,128], index: 16, kind: input, shape index: {}]
  %s17 = inlined_call_operand.vmem [shape: f32[1,128], index: 17, kind: input, shape index: {}]
  %s18 = inlined_call_operand.vmem [shape: f32[128,128], index: 18, kind: input, shape index: {}]
  %s19 = inlined_call_operand.vmem [shape: f32[1,128], index: 19, kind: input, shape index: {}]
  %s20 = inlined_call_operand.hbm [shape: f32[2,128], index: 20, kind: output, shape index: {}]
  %s21 = sld [smem:[#allocation0]]
  $region90: #{tpu_custom_call.1} parent=0
    _
  %s23 = ssub.s32 1, %s21
  %s24 = scalar_select 0, %s23, %s21
  $region1: #{tpu_custom_call.1} parent=0
    #allocation2 [shape = 'u8[1024]{0}', space=vmem, size = 0x400, scoped, tag = 'output window, operand 0, single buffered']
    #allocation3 [shape = 's32[1]{0}', space=sflag, size = 0x4, scoped, tag = 'scoped memory for tpu_custom_call.1']
    %25 = vsyncpa [#allocation3], 0
    // Predicated region
    $region2: #{tpu_custom_call.1} parent=1 // pred_check
      _
    $region3: #{tpu_custom_call.1} parent=1 // pred_check_branch
      %27 = sbr.rel (0) target = $region5
    $region4: #{tpu_custom_call.1} parent=1 // pred_region
      _
    $region5: #{tpu_custom_call.1} parent=1 // pred_fallthru
      _
    // Predicated region
    $region6: #{tpu_custom_call.1} parent=1 // pred_check
      _
    $region7: #{tpu_custom_call.1} parent=1 // pred_check_branch
      %29 = sbr.rel (0) target = $region9
    $region8: #{tpu_custom_call.1} parent=1 // pred_region
      _
    $region9: #{tpu_custom_call.1} parent=1 // pred_fallthru
      _
    // Predicated region
    $region10: #{tpu_custom_call.1} parent=1 // pred_check
      _
    $region11: #{tpu_custom_call.1} parent=1 // pred_check_branch
      %31 = sbr.rel (0) target = $region13
    $region12: #{tpu_custom_call.1} parent=1 // pred_region
      _
    $region13: #{tpu_custom_call.1} parent=1 // pred_fallthru
      _
    // Predicated region
    $region14: #{tpu_custom_call.1} parent=1 // pred_check
      _
    $region15: #{tpu_custom_call.1} parent=1 // pred_check_branch
      %33 = sbr.rel (0) target = $region17
    $region16: #{tpu_custom_call.1} parent=1 // pred_region
      _
    $region17: #{tpu_custom_call.1} parent=1 // pred_fallthru
      _
    // Predicated region
    $region18: #{tpu_custom_call.1} parent=1 // pred_check
      _
    $region19: #{tpu_custom_call.1} parent=1 // pred_check_branch
      %35 = sbr.rel (0) target = $region21
    $region20: #{tpu_custom_call.1} parent=1 // pred_region
      _
    $region21: #{tpu_custom_call.1} parent=1 // pred_fallthru
      _
    // Predicated region
    $region22: #{tpu_custom_call.1} parent=1 // pred_check
      _
    $region23: #{tpu_custom_call.1} parent=1 // pred_check_branch
      %37 = sbr.rel (0) target = $region25
    $region24: #{tpu_custom_call.1} parent=1 // pred_region
      _
    $region25: #{tpu_custom_call.1} parent=1 // pred_fallthru
      _
    // Predicated region
    $region26: #{tpu_custom_call.1} parent=1 // pred_check
      _
    $region27: #{tpu_custom_call.1} parent=1 // pred_check_branch
      %39 = sbr.rel (0) target = $region29
    $region28: #{tpu_custom_call.1} parent=1 // pred_region
      _
    $region29: #{tpu_custom_call.1} parent=1 // pred_fallthru
      _
    // Predicated region
    $region30: #{tpu_custom_call.1} parent=1 // pred_check
      _
    $region31: #{tpu_custom_call.1} parent=1 // pred_check_branch
      %41 = sbr.rel (0) target = $region33
    $region32: #{tpu_custom_call.1} parent=1 // pred_region
      _
    $region33: #{tpu_custom_call.1} parent=1 // pred_fallthru
      _
    // Predicated region
    $region34: #{tpu_custom_call.1} parent=1 // pred_check
      _
    $region35: #{tpu_custom_call.1} parent=1 // pred_check_branch
      %43 = sbr.rel (0) target = $region37
    $region36: #{tpu_custom_call.1} parent=1 // pred_region
      _
    $region37: #{tpu_custom_call.1} parent=1 // pred_fallthru
      _
    // Predicated region
    $region38: #{tpu_custom_call.1} parent=1 // pred_check
      _
    $region39: #{tpu_custom_call.1} parent=1 // pred_check_branch
      %45 = sbr.rel (0) target = $region41
    $region40: #{tpu_custom_call.1} parent=1 // pred_region
      _
    $region41: #{tpu_custom_call.1} parent=1 // pred_fallthru
      _
    // Predicated region
    $region42: #{tpu_custom_call.1} parent=1 // pred_check
      _
    $region43: #{tpu_custom_call.1} parent=1 // pred_check_branch
      %47 = sbr.rel (0) target = $region45
    $region44: #{tpu_custom_call.1} parent=1 // pred_region
      _
    $region45: #{tpu_custom_call.1} parent=1 // pred_fallthru
      _
    // Predicated region
    $region46: #{tpu_custom_call.1} parent=1 // pred_check
      _
    $region47: #{tpu_custom_call.1} parent=1 // pred_check_branch
      %49 = sbr.rel (0) target = $region49
    $region48: #{tpu_custom_call.1} parent=1 // pred_region
      _
    $region49: #{tpu_custom_call.1} parent=1 // pred_fallthru
      _
    // Predicated region
    $region50: #{tpu_custom_call.1} parent=1 // pred_check
      _
    $region51: #{tpu_custom_call.1} parent=1 // pred_check_branch
      %51 = sbr.rel (0) target = $region53
    $region52: #{tpu_custom_call.1} parent=1 // pred_region
      _
    $region53: #{tpu_custom_call.1} parent=1 // pred_fallthru
      _
    // Predicated region
    $region54: #{tpu_custom_call.1} parent=1 // pred_check
      _
    $region55: #{tpu_custom_call.1} parent=1 // pred_check_branch
      %53 = sbr.rel (0) target = $region57
    $region56: #{tpu_custom_call.1} parent=1 // pred_region
      _
    $region57: #{tpu_custom_call.1} parent=1 // pred_fallthru
      _
    // Predicated region
    $region58: #{tpu_custom_call.1} parent=1 // pred_check
      _
    $region59: #{tpu_custom_call.1} parent=1 // pred_check_branch
      %55 = sbr.rel (0) target = $region61
    $region60: #{tpu_custom_call.1} parent=1 // pred_region
      _
    $region61: #{tpu_custom_call.1} parent=1 // pred_fallthru
      _
    // Predicated region
    $region62: #{tpu_custom_call.1} parent=1 // pred_check
      _
    $region63: #{tpu_custom_call.1} parent=1 // pred_check_branch
      %57 = sbr.rel (0) target = $region65
    $region64: #{tpu_custom_call.1} parent=1 // pred_region
      _
    $region65: #{tpu_custom_call.1} parent=1 // pred_fallthru
      _
    // Predicated region
    $region66: #{tpu_custom_call.1} parent=1 // pred_check
      _
    $region67: #{tpu_custom_call.1} parent=1 // pred_check_branch
      %59 = sbr.rel (0) target = $region69
    $region68: #{tpu_custom_call.1} parent=1 // pred_region
      _
    $region69: #{tpu_custom_call.1} parent=1 // pred_fallthru
      _
    // Predicated region
    $region70: #{tpu_custom_call.1} parent=1 // pred_check
      _
    $region71: #{tpu_custom_call.1} parent=1 // pred_check_branch
      %61 = sbr.rel (0) target = $region73
    $region72: #{tpu_custom_call.1} parent=1 // pred_region
      _
    $region73: #{tpu_custom_call.1} parent=1 // pred_fallthru
      _
    // Predicated region
    $region74: #{tpu_custom_call.1} parent=1 // pred_check
      _
    $region75: #{tpu_custom_call.1} parent=1 // pred_check_branch
      %63 = sbr.rel (0) target = $region77
    $region76: #{tpu_custom_call.1} parent=1 // pred_region
      _
    $region77: #{tpu_custom_call.1} parent=1 // pred_fallthru
      _
    // Predicated region
    $region78: #{tpu_custom_call.1} parent=1 // pred_check
      _
    $region79: #{tpu_custom_call.1} parent=1 // pred_check_branch
      %65 = sbr.rel (0) target = $region81
    $region80: #{tpu_custom_call.1} parent=1 // pred_region
      _
    $region81: #{tpu_custom_call.1} parent=1 // pred_fallthru
      _
    %v66 = vld [vmem:[%s0] sm:$0xff]
    %v67 = vld [vmem:[%s0 + $0x8] sm:$0xff]
    %v68 = vld [vmem:[%s3] sm:$0xff]
    %v69 = vld [vmem:[%s3 + $0x8] sm:$0xff]
    %v70 = vld [vmem:[%s3 + $0x10] sm:$0xff]
    %v71 = vld [vmem:[%s3 + $0x18] sm:$0xff]
    %v72 = vld [vmem:[%s3 + $0x20] sm:$0xff]
    %v73 = vld [vmem:[%s3 + $0x28] sm:$0xff]
    %v74 = vld [vmem:[%s3 + $0x30] sm:$0xff]
    %v75 = vld [vmem:[%s3 + $0x38] sm:$0xff]
    %v76 = vld [vmem:[%s3 + $0x40] sm:$0xff]
    %v77 = vld [vmem:[%s3 + $0x48] sm:$0xff]
    %v78 = vld [vmem:[%s3 + $0x50] sm:$0xff]
    %v79 = vld [vmem:[%s3 + $0x58] sm:$0xff]
    %v80 = vld [vmem:[%s3 + $0x60] sm:$0xff]
    %v81 = vld [vmem:[%s3 + $0x68] sm:$0xff]
    %v82 = vld [vmem:[%s3 + $0x70] sm:$0xff]
    %v83 = vld [vmem:[%s3 + $0x78] sm:$0xff]
    %v84 = vld [vmem:[%s1] sm:$0xff]
    %v85 = vld [vmem:[%s1 + $0x8] sm:$0xff]
    %86 = vmatpush.msra.mxu0 %v83
    %87 = vmatpush.msra.mxu0 %v82
    %88 = vmatpush.msra.mxu0 %v81
    %89 = vmatpush.msra.mxu0 %v80
    %90 = vmatpush.msra.mxu0 %v79
    %91 = vmatpush.msra.mxu0 %v78
    %92 = vmatpush.msra.mxu0 %v77
    %93 = vmatpush.msra.mxu0 %v76
    %94 = vmatpush.msra.mxu0 %v75
    %95 = vmatpush.msra.mxu0 %v74
    %96 = vmatpush.msra.mxu0 %v73
    %97 = vmatpush.msra.mxu0 %v72
    %98 = vmatpush.msra.mxu0 %v71
    %99 = vmatpush.msra.mxu0 %v70
    %100 = vmatpush.msra.mxu0 %v69
    %101 = vmatpush.msra.mxu0 %v68
    %102 = vmatmul.f32.gmra.mxu0 %v66
    %v103 = vpop.f32.mrf.mxu0
    %v104 = vadd.f32 %v84, %v103
    %105 = vmatmul.f32.gmra.mxu0 %v67
    %v106 = vpop.f32.mrf.mxu0
    %v107 = vadd.f32 %v85, %v106
    %108 = vdwg.mxu0
    %v109 = vld [vmem:[%s4] sm:$0xff]
    %v110 = vld [vmem:[%s4 + $0x8] sm:$0xff]
    %v111 = vld [vmem:[%s4 + $0x10] sm:$0xff]
    %v112 = vld [vmem:[%s4 + $0x18] sm:$0xff]
    %v113 = vld [vmem:[%s5] sm:$0x1]
    %v114 = vld [vmem:[%s6] sm:$0xff]
    %v115 = vld [vmem:[%s6 + $0x8] sm:$0xff]
    %v116 = vld [vmem:[%s6 + $0x10] sm:$0xff]
    %v117 = vld [vmem:[%s6 + $0x18] sm:$0xff]
    %v118 = vld [vmem:[%s7] sm:$0x1]
    %v119 = vld [vmem:[%s8] sm:$0x1]
    %v120 = vld [vmem:[%s9] sm:$0x1]
    %v121 = vld [vmem:[%s10] sm:$0x1]
    %v122 = vld [vmem:[%s11] sm:$0x1]
    %v123 = vld [vmem:[%s12] sm:$0xff]
    %v124 = vld [vmem:[%s12 + $0x8] sm:$0xff]
    %v125 = vld [vmem:[%s12 + $0x10] sm:$0xff]
    %v126 = vld [vmem:[%s12 + $0x18] sm:$0xff]
    %v127 = vld [vmem:[%s13] sm:$0x1]
    %v128 = vld [vmem:[%s14] sm:$0xff]
    %v129 = vld [vmem:[%s14 + $0x8] sm:$0xff]
    %v130 = vld [vmem:[%s14 + $0x10] sm:$0xff]
    %v131 = vld [vmem:[%s14 + $0x18] sm:$0xff]
    %v132 = vld [vmem:[%s14 + $0x20] sm:$0xff]
    %v133 = vld [vmem:[%s14 + $0x28] sm:$0xff]
    %v134 = vld [vmem:[%s14 + $0x30] sm:$0xff]
    %v135 = vld [vmem:[%s14 + $0x38] sm:$0xff]
    %v136 = vld [vmem:[%s14 + $0x40] sm:$0xff]
    %v137 = vld [vmem:[%s14 + $0x48] sm:$0xff]
    %v138 = vld [vmem:[%s14 + $0x50] sm:$0xff]
    %v139 = vld [vmem:[%s14 + $0x58] sm:$0xff]
    %v140 = vld [vmem:[%s14 + $0x60] sm:$0xff]
    %v141 = vld [vmem:[%s14 + $0x68] sm:$0xff]
    %v142 = vld [vmem:[%s14 + $0x70] sm:$0xff]
    %v143 = vld [vmem:[%s14 + $0x78] sm:$0xff]
    %v144 = vld [vmem:[%s15] sm:$0x1]
    %v146 = vperm.slane %v113, 0
    %vm148 = vcmask 261120
    %v150 = vsel %vm148, %v104, 0
    %v153 = vsel %vm148, %v107, 0
    %155 = vmatpush.msra.mxu0 0.0
    %156 = vmatpush.msra.mxu0 0.0
    %157 = vmatpush.msra.mxu0 0.0
    %158 = vmatpush.msra.mxu0 0.0
    %159 = vmatpush.msra.mxu0 0.0
    %160 = vmatpush.msra.mxu0 0.0
    %161 = vmatpush.msra.mxu0 0.0
    %162 = vmatpush.msra.mxu0 0.0
    %163 = vmatpush.msra.mxu0 0.0
    %164 = vmatpush.msra.mxu0 0.0
    %165 = vmatpush.msra.mxu0 0.0
    %166 = vmatpush.msra.mxu0 0.0
    %167 = vmatpush.msra.mxu0 %v112
    %168 = vmatpush.msra.mxu0 %v111
    %169 = vmatpush.msra.mxu0 %v110
    %170 = vmatpush.msra.mxu0 %v109
    %171 = vmatmul.f32.gmra.mxu0 %v150
    %v172 = vpop.f32.mrf.mxu0
    %v173 = vadd.f32 %v146, %v172
    %174 = vmatmul.f32.gmra.mxu0 %v153
    %v175 = vpop.f32.mrf.mxu0
    %v176 = vadd.f32 %v146, %v175
    %177 = vdwg.mxu0
    %179 = vrot.lane.b32.xlu0 %v173, 96
    %v180 = vpop.permute.xlu0 %179
    %vm181 = vcmask 64512
    %v182 = vsel %vm181, %v173, 0
    %v184 = vsel %vm181, %v180, 0
    %186 = vmatpush.xpose.msra.mxu0 0.0
    %187 = vmatpush.xpose.msra.mxu0 0.0
    %188 = vmatpush.xpose.msra.mxu0 0.0
    %189 = vmatpush.xpose.msra.mxu0 0.0
    %190 = vmatpush.xpose.msra.mxu0 0.0
    %191 = vmatpush.xpose.msra.mxu0 0.0
    %192 = vmatpush.xpose.msra.mxu0 0.0
    %193 = vmatpush.xpose.msra.mxu0 0.0
    %194 = vmatpush.xpose.msra.mxu0 0.0
    %195 = vmatpush.xpose.msra.mxu0 0.0
    %196 = vmatpush.xpose.msra.mxu0 0.0
    %197 = vmatpush.xpose.msra.mxu0 0.0
    %198 = vmatpush.xpose.msra.mxu0 0.0
    %199 = vmatpush.xpose.msra.mxu0 0.0
    %200 = vmatpush.xpose.msra.mxu0 0.0
    %201 = vmatpush.xpose.msra.mxu0 %v184
    %202 = vmatmul.f32.gmra.mxu0 %v182
    %v203 = vpop.f32.mrf.mxu0
    %v204 = vadd.f32 0.0, %v203
    %205 = vdwg.mxu0
    %207 = vrot.lane.b32.xlu0 %v176, 96
    %v208 = vpop.permute.xlu0 %207
    %v209 = vsel %vm181, %v176, 0
    %v211 = vsel %vm181, %v208, 0
    %213 = vmatpush.xpose.msra.mxu0 0.0
    %214 = vmatpush.xpose.msra.mxu0 0.0
    %215 = vmatpush.xpose.msra.mxu0 0.0
    %216 = vmatpush.xpose.msra.mxu0 0.0
    %217 = vmatpush.xpose.msra.mxu0 0.0
    %218 = vmatpush.xpose.msra.mxu0 0.0
    %219 = vmatpush.xpose.msra.mxu0 0.0
    %220 = vmatpush.xpose.msra.mxu0 0.0
    %221 = vmatpush.xpose.msra.mxu0 0.0
    %222 = vmatpush.xpose.msra.mxu0 0.0
    %223 = vmatpush.xpose.msra.mxu0 0.0
    %224 = vmatpush.xpose.msra.mxu0 0.0
    %225 = vmatpush.xpose.msra.mxu0 0.0
    %226 = vmatpush.xpose.msra.mxu0 0.0
    %227 = vmatpush.xpose.msra.mxu0 0.0
    %228 = vmatpush.xpose.msra.mxu0 %v211
    %229 = vmatmul.f32.gmra.mxu0 %v209
    %v230 = vpop.f32.mrf.mxu0
    %v231 = vadd.f32 0.0, %v230
    %232 = vdwg.mxu0
    %v233 = vsel %vm181, %v204, -inf
    %234 = vmax.xlane.f32.xlu0 %v233
    %v235 = vpop.xlane.xlu0 %234
    %v236 = vsel %vm181, %v231, -inf
    %237 = vmax.xlane.f32.xlu0 %v236
    %v238 = vpop.xlane.xlu0 %237
    %v239 = vsub.f32 %v204, %v235
    %v240 = vsub.f32 %v231, %v238
    %v241 = vmul.f32 %v239, 1.442695
    %v242 = vpow.pop %v241
    %v243 = vmul.f32 %v240, 1.442695
    %v244 = vpow.pop %v243
    %v245 = vsel %vm181, %v242, 0.0
    %246 = vadd.xlane.f32.xlu0 %v245
    %v247 = vpop.xlane.xlu0 %246
    %v248 = vsel %vm181, %v244, 0.0
    %249 = vadd.xlane.f32.xlu0 %v248
    %v250 = vpop.xlane.xlu0 %249
    %v251 = vrcp.pop %v247
    %v252 = vrcp.pop %v250
    %v253 = vmul.f32 %v242, %v251
    %v254 = vmul.f32 %v244, %v252
    %255 = vrot.lane.b32.xlu0 %v173, 64
    %v256 = vpop.permute.xlu0 %255
    %v259 = vsel %vm181, %v253, 0
    %261 = vmatpush.msra.mxu0 0.0
    %262 = vmatpush.msra.mxu0 0.0
    %263 = vmatpush.msra.mxu0 0.0
    %264 = vmatpush.msra.mxu0 0.0
    %265 = vmatpush.msra.mxu0 0.0
    %266 = vmatpush.msra.mxu0 0.0
    %267 = vmatpush.msra.mxu0 0.0
    %268 = vmatpush.msra.mxu0 0.0
    %269 = vmatpush.msra.mxu0 0.0
    %270 = vmatpush.msra.mxu0 0.0
    %271 = vmatpush.msra.mxu0 0.0
    %272 = vmatpush.msra.mxu0 0.0
    %273 = vmatpush.msra.mxu0 0.0
    %274 = vmatpush.msra.mxu0 0.0
    %275 = vmatpush.msra.mxu0 0.0
    %276 = vmatpush.msra.mxu0 %v256
    %277 = vmatmul.f32.gmra.mxu0 %v259
    %v278 = vpop.f32.mrf.mxu0
    %v279 = vadd.f32 0.0, %v278
    %280 = vdwg.mxu0
    %281 = vrot.lane.b32.xlu0 %v176, 64
    %v282 = vpop.permute.xlu0 %281
    %v285 = vsel %vm181, %v254, 0
    %287 = vmatpush.msra.mxu0 0.0
    %288 = vmatpush.msra.mxu0 0.0
    %289 = vmatpush.msra.mxu0 0.0
    %290 = vmatpush.msra.mxu0 0.0
    %291 = vmatpush.msra.mxu0 0.0
    %292 = vmatpush.msra.mxu0 0.0
    %293 = vmatpush.msra.mxu0 0.0
    %294 = vmatpush.msra.mxu0 0.0
    %295 = vmatpush.msra.mxu0 0.0
    %296 = vmatpush.msra.mxu0 0.0
    %297 = vmatpush.msra.mxu0 0.0
    %298 = vmatpush.msra.mxu0 0.0
    %299 = vmatpush.msra.mxu0 0.0
    %300 = vmatpush.msra.mxu0 0.0
    %301 = vmatpush.msra.mxu0 0.0
    %302 = vmatpush.msra.mxu0 %v282
    %303 = vmatmul.f32.gmra.mxu0 %v285
    %v304 = vpop.f32.mrf.mxu0
    %v305 = vadd.f32 0.0, %v304
    %306 = vdwg.mxu0
    %307 = vrot.lane.b32.xlu0 %v173, 120
    %v308 = vpop.permute.xlu0 %307
    %309 = vrot.lane.b32.xlu0 %v173, 88
    %v310 = vpop.permute.xlu0 %309
    %v311 = vsel %vm181, %v308, 0
    %v313 = vsel %vm181, %v310, 0
    %315 = vmatpush.xpose.msra.mxu0 0.0
    %316 = vmatpush.xpose.msra.mxu0 0.0
    %317 = vmatpush.xpose.msra.mxu0 0.0
    %318 = vmatpush.xpose.msra.mxu0 0.0
    %319 = vmatpush.xpose.msra.mxu0 0.0
    %320 = vmatpush.xpose.msra.mxu0 0.0
    %321 = vmatpush.xpose.msra.mxu0 0.0
    %322 = vmatpush.xpose.msra.mxu0 0.0
    %323 = vmatpush.xpose.msra.mxu0 0.0
    %324 = vmatpush.xpose.msra.mxu0 0.0
    %325 = vmatpush.xpose.msra.mxu0 0.0
    %326 = vmatpush.xpose.msra.mxu0 0.0
    %327 = vmatpush.xpose.msra.mxu0 0.0
    %328 = vmatpush.xpose.msra.mxu0 0.0
    %329 = vmatpush.xpose.msra.mxu0 0.0
    %330 = vmatpush.xpose.msra.mxu0 %v313
    %331 = vmatmul.f32.gmra.mxu0 %v311
    %v332 = vpop.f32.mrf.mxu0
    %v333 = vadd.f32 0.0, %v332
    %334 = vdwg.mxu0
    %335 = vrot.lane.b32.xlu0 %v176, 120
    %v336 = vpop.permute.xlu0 %335
    %337 = vrot.lane.b32.xlu0 %v176, 88
    %v338 = vpop.permute.xlu0 %337
    %v339 = vsel %vm181, %v336, 0
    %v341 = vsel %vm181, %v338, 0
    %343 = vmatpush.xpose.msra.mxu0 0.0
    %344 = vmatpush.xpose.msra.mxu0 0.0
    %345 = vmatpush.xpose.msra.mxu0 0.0
    %346 = vmatpush.xpose.msra.mxu0 0.0
    %347 = vmatpush.xpose.msra.mxu0 0.0
    %348 = vmatpush.xpose.msra.mxu0 0.0
    %349 = vmatpush.xpose.msra.mxu0 0.0
    %350 = vmatpush.xpose.msra.mxu0 0.0
    %351 = vmatpush.xpose.msra.mxu0 0.0
    %352 = vmatpush.xpose.msra.mxu0 0.0
    %353 = vmatpush.xpose.msra.mxu0 0.0
    %354 = vmatpush.xpose.msra.mxu0 0.0
    %355 = vmatpush.xpose.msra.mxu0 0.0
    %356 = vmatpush.xpose.msra.mxu0 0.0
    %357 = vmatpush.xpose.msra.mxu0 0.0
    %358 = vmatpush.xpose.msra.mxu0 %v341
    %359 = vmatmul.f32.gmra.mxu0 %v339
    %v360 = vpop.f32.mrf.mxu0
    %v361 = vadd.f32 0.0, %v360
    %362 = vdwg.mxu0
    %v363 = vsel %vm181, %v333, -inf
    %364 = vmax.xlane.f32.xlu0 %v363
    %v365 = vpop.xlane.xlu0 %364
    %v366 = vsel %vm181, %v361, -inf
    %367 = vmax.xlane.f32.xlu0 %v366
    %v368 = vpop.xlane.xlu0 %367
    %v369 = vsub.f32 %v333, %v365
    %v370 = vsub.f32 %v361, %v368
    %v371 = vmul.f32 %v369, 1.442695
    %v372 = vpow.pop %v371
    %v373 = vmul.f32 %v370, 1.442695
    %v374 = vpow.pop %v373
    %v375 = vsel %vm181, %v372, 0.0
    %376 = vadd.xlane.f32.xlu0 %v375
    %v377 = vpop.xlane.xlu0 %376
    %v378 = vsel %vm181, %v374, 0.0
    %379 = vadd.xlane.f32.xlu0 %v378
    %v380 = vpop.xlane.xlu0 %379
    %v381 = vrcp.pop %v377
    %v382 = vrcp.pop %v380
    %v383 = vmul.f32 %v372, %v381
    %v384 = vmul.f32 %v374, %v382
    %385 = vrot.lane.b32.xlu0 %v173, 56
    %v386 = vpop.permute.xlu0 %385
    %v389 = vsel %vm181, %v383, 0
    %391 = vmatpush.msra.mxu0 0.0
    %392 = vmatpush.msra.mxu0 0.0
    %393 = vmatpush.msra.mxu0 0.0
    %394 = vmatpush.msra.mxu0 0.0
    %395 = vmatpush.msra.mxu0 0.0
    %396 = vmatpush.msra.mxu0 0.0
    %397 = vmatpush.msra.mxu0 0.0
    %398 = vmatpush.msra.mxu0 0.0
    %399 = vmatpush.msra.mxu0 0.0
    %400 = vmatpush.msra.mxu0 0.0
    %401 = vmatpush.msra.mxu0 0.0
    %402 = vmatpush.msra.mxu0 0.0
    %403 = vmatpush.msra.mxu0 0.0
    %404 = vmatpush.msra.mxu0 0.0
    %405 = vmatpush.msra.mxu0 0.0
    %406 = vmatpush.msra.mxu0 %v386
    %407 = vmatmul.f32.gmra.mxu0 %v389
    %v408 = vpop.f32.mrf.mxu0
    %v409 = vadd.f32 0.0, %v408
    %410 = vdwg.mxu0
    %411 = vrot.lane.b32.xlu0 %v176, 56
    %v412 = vpop.permute.xlu0 %411
    %v415 = vsel %vm181, %v384, 0
    %417 = vmatpush.msra.mxu0 0.0
    %418 = vmatpush.msra.mxu0 0.0
    %419 = vmatpush.msra.mxu0 0.0
    %420 = vmatpush.msra.mxu0 0.0
    %421 = vmatpush.msra.mxu0 0.0
    %422 = vmatpush.msra.mxu0 0.0
    %423 = vmatpush.msra.mxu0 0.0
    %424 = vmatpush.msra.mxu0 0.0
    %425 = vmatpush.msra.mxu0 0.0
    %426 = vmatpush.msra.mxu0 0.0
    %427 = vmatpush.msra.mxu0 0.0
    %428 = vmatpush.msra.mxu0 0.0
    %429 = vmatpush.msra.mxu0 0.0
    %430 = vmatpush.msra.mxu0 0.0
    %431 = vmatpush.msra.mxu0 0.0
    %432 = vmatpush.msra.mxu0 %v412
    %433 = vmatmul.f32.gmra.mxu0 %v415
    %v434 = vpop.f32.mrf.mxu0
    %v435 = vadd.f32 0.0, %v434
    %436 = vdwg.mxu0
    %437 = vrot.lane.b32.xlu0 %v173, 112
    %v438 = vpop.permute.xlu0 %437
    %439 = vrot.lane.b32.xlu0 %v173, 80
    %v440 = vpop.permute.xlu0 %439
    %v441 = vsel %vm181, %v438, 0
    %v443 = vsel %vm181, %v440, 0
    %445 = vmatpush.xpose.msra.mxu0 0.0
    %446 = vmatpush.xpose.msra.mxu0 0.0
    %447 = vmatpush.xpose.msra.mxu0 0.0
    %448 = vmatpush.xpose.msra.mxu0 0.0
    %449 = vmatpush.xpose.msra.mxu0 0.0
    %450 = vmatpush.xpose.msra.mxu0 0.0
    %451 = vmatpush.xpose.msra.mxu0 0.0
    %452 = vmatpush.xpose.msra.mxu0 0.0
    %453 = vmatpush.xpose.msra.mxu0 0.0
    %454 = vmatpush.xpose.msra.mxu0 0.0
    %455 = vmatpush.xpose.msra.mxu0 0.0
    %456 = vmatpush.xpose.msra.mxu0 0.0
    %457 = vmatpush.xpose.msra.mxu0 0.0
    %458 = vmatpush.xpose.msra.mxu0 0.0
    %459 = vmatpush.xpose.msra.mxu0 0.0
    %460 = vmatpush.xpose.msra.mxu0 %v443
    %461 = vmatmul.f32.gmra.mxu0 %v441
    %v462 = vpop.f32.mrf.mxu0
    %v463 = vadd.f32 0.0, %v462
    %464 = vdwg.mxu0
    %465 = vrot.lane.b32.xlu0 %v176, 112
    %v466 = vpop.permute.xlu0 %465
    %467 = vrot.lane.b32.xlu0 %v176, 80
    %v468 = vpop.permute.xlu0 %467
    %v469 = vsel %vm181, %v466, 0
    %v471 = vsel %vm181, %v468, 0
    %473 = vmatpush.xpose.msra.mxu0 0.0
    %474 = vmatpush.xpose.msra.mxu0 0.0
    %475 = vmatpush.xpose.msra.mxu0 0.0
    %476 = vmatpush.xpose.msra.mxu0 0.0
    %477 = vmatpush.xpose.msra.mxu0 0.0
    %478 = vmatpush.xpose.msra.mxu0 0.0
    %479 = vmatpush.xpose.msra.mxu0 0.0
    %480 = vmatpush.xpose.msra.mxu0 0.0
    %481 = vmatpush.xpose.msra.mxu0 0.0
    %482 = vmatpush.xpose.msra.mxu0 0.0
    %483 = vmatpush.xpose.msra.mxu0 0.0
    %484 = vmatpush.xpose.msra.mxu0 0.0
    %485 = vmatpush.xpose.msra.mxu0 0.0
    %486 = vmatpush.xpose.msra.mxu0 0.0
    %487 = vmatpush.xpose.msra.mxu0 0.0
    %488 = vmatpush.xpose.msra.mxu0 %v471
    %489 = vmatmul.f32.gmra.mxu0 %v469
    %v490 = vpop.f32.mrf.mxu0
    %v491 = vadd.f32 0.0, %v490
    %492 = vdwg.mxu0
    %v493 = vsel %vm181, %v463, -inf
    %494 = vmax.xlane.f32.xlu0 %v493
    %v495 = vpop.xlane.xlu0 %494
    %v496 = vsel %vm181, %v491, -inf
    %497 = vmax.xlane.f32.xlu0 %v496
    %v498 = vpop.xlane.xlu0 %497
    %v499 = vsub.f32 %v463, %v495
    %v500 = vsub.f32 %v491, %v498
    %v501 = vmul.f32 %v499, 1.442695
    %v502 = vpow.pop %v501
    %v503 = vmul.f32 %v500, 1.442695
    %v504 = vpow.pop %v503
    %v505 = vsel %vm181, %v502, 0.0
    %506 = vadd.xlane.f32.xlu0 %v505
    %v507 = vpop.xlane.xlu0 %506
    %v508 = vsel %vm181, %v504, 0.0
    %509 = vadd.xlane.f32.xlu0 %v508
    %v510 = vpop.xlane.xlu0 %509
    %v511 = vrcp.pop %v507
    %v512 = vrcp.pop %v510
    %v513 = vmul.f32 %v502, %v511
    %v514 = vmul.f32 %v504, %v512
    %515 = vrot.lane.b32.xlu0 %v173, 48
    %v516 = vpop.permute.xlu0 %515
    %v519 = vsel %vm181, %v513, 0
    %521 = vmatpush.msra.mxu0 0.0
    %522 = vmatpush.msra.mxu0 0.0
    %523 = vmatpush.msra.mxu0 0.0
    %524 = vmatpush.msra.mxu0 0.0
    %525 = vmatpush.msra.mxu0 0.0
    %526 = vmatpush.msra.mxu0 0.0
    %527 = vmatpush.msra.mxu0 0.0
    %528 = vmatpush.msra.mxu0 0.0
    %529 = vmatpush.msra.mxu0 0.0
    %530 = vmatpush.msra.mxu0 0.0
    %531 = vmatpush.msra.mxu0 0.0
    %532 = vmatpush.msra.mxu0 0.0
    %533 = vmatpush.msra.mxu0 0.0
    %534 = vmatpush.msra.mxu0 0.0
    %535 = vmatpush.msra.mxu0 0.0
    %536 = vmatpush.msra.mxu0 %v516
    %537 = vmatmul.f32.gmra.mxu0 %v519
    %v538 = vpop.f32.mrf.mxu0
    %v539 = vadd.f32 0.0, %v538
    %540 = vdwg.mxu0
    %541 = vrot.lane.b32.xlu0 %v176, 48
    %v542 = vpop.permute.xlu0 %541
    %v545 = vsel %vm181, %v514, 0
    %547 = vmatpush.msra.mxu0 0.0
    %548 = vmatpush.msra.mxu0 0.0
    %549 = vmatpush.msra.mxu0 0.0
    %550 = vmatpush.msra.mxu0 0.0
    %551 = vmatpush.msra.mxu0 0.0
    %552 = vmatpush.msra.mxu0 0.0
    %553 = vmatpush.msra.mxu0 0.0
    %554 = vmatpush.msra.mxu0 0.0
    %555 = vmatpush.msra.mxu0 0.0
    %556 = vmatpush.msra.mxu0 0.0
    %557 = vmatpush.msra.mxu0 0.0
    %558 = vmatpush.msra.mxu0 0.0
    %559 = vmatpush.msra.mxu0 0.0
    %560 = vmatpush.msra.mxu0 0.0
    %561 = vmatpush.msra.mxu0 0.0
    %562 = vmatpush.msra.mxu0 %v542
    %563 = vmatmul.f32.gmra.mxu0 %v545
    %v564 = vpop.f32.mrf.mxu0
    %v565 = vadd.f32 0.0, %v564
    %566 = vdwg.mxu0
    %567 = vrot.lane.b32.xlu0 %v173, 104
    %v568 = vpop.permute.xlu0 %567
    %569 = vrot.lane.b32.xlu0 %v173, 72
    %v570 = vpop.permute.xlu0 %569
    %v571 = vsel %vm181, %v568, 0
    %v573 = vsel %vm181, %v570, 0
    %575 = vmatpush.xpose.msra.mxu0 0.0
    %576 = vmatpush.xpose.msra.mxu0 0.0
    %577 = vmatpush.xpose.msra.mxu0 0.0
    %578 = vmatpush.xpose.msra.mxu0 0.0
    %579 = vmatpush.xpose.msra.mxu0 0.0
    %580 = vmatpush.xpose.msra.mxu0 0.0
    %581 = vmatpush.xpose.msra.mxu0 0.0
    %582 = vmatpush.xpose.msra.mxu0 0.0
    %583 = vmatpush.xpose.msra.mxu0 0.0
    %584 = vmatpush.xpose.msra.mxu0 0.0
    %585 = vmatpush.xpose.msra.mxu0 0.0
    %586 = vmatpush.xpose.msra.mxu0 0.0
    %587 = vmatpush.xpose.msra.mxu0 0.0
    %588 = vmatpush.xpose.msra.mxu0 0.0
    %589 = vmatpush.xpose.msra.mxu0 0.0
    %590 = vmatpush.xpose.msra.mxu0 %v573
    %591 = vmatmul.f32.gmra.mxu0 %v571
    %v592 = vpop.f32.mrf.mxu0
    %v593 = vadd.f32 0.0, %v592
    %594 = vdwg.mxu0
    %595 = vrot.lane.b32.xlu0 %v176, 104
    %v596 = vpop.permute.xlu0 %595
    %597 = vrot.lane.b32.xlu0 %v176, 72
    %v598 = vpop.permute.xlu0 %597
    %v599 = vsel %vm181, %v596, 0
    %v601 = vsel %vm181, %v598, 0
    %603 = vmatpush.xpose.msra.mxu0 0.0
    %604 = vmatpush.xpose.msra.mxu0 0.0
    %605 = vmatpush.xpose.msra.mxu0 0.0
    %606 = vmatpush.xpose.msra.mxu0 0.0
    %607 = vmatpush.xpose.msra.mxu0 0.0
    %608 = vmatpush.xpose.msra.mxu0 0.0
    %609 = vmatpush.xpose.msra.mxu0 0.0
    %610 = vmatpush.xpose.msra.mxu0 0.0
    %611 = vmatpush.xpose.msra.mxu0 0.0
    %612 = vmatpush.xpose.msra.mxu0 0.0
    %613 = vmatpush.xpose.msra.mxu0 0.0
    %614 = vmatpush.xpose.msra.mxu0 0.0
    %615 = vmatpush.xpose.msra.mxu0 0.0
    %616 = vmatpush.xpose.msra.mxu0 0.0
    %617 = vmatpush.xpose.msra.mxu0 0.0
    %618 = vmatpush.xpose.msra.mxu0 %v601
    %619 = vmatmul.f32.gmra.mxu0 %v599
    %v620 = vpop.f32.mrf.mxu0
    %v621 = vadd.f32 0.0, %v620
    %622 = vdwg.mxu0
    %v623 = vsel %vm181, %v593, -inf
    %624 = vmax.xlane.f32.xlu0 %v623
    %v625 = vpop.xlane.xlu0 %624
    %v626 = vsel %vm181, %v621, -inf
    %627 = vmax.xlane.f32.xlu0 %v626
    %v628 = vpop.xlane.xlu0 %627
    %v629 = vsub.f32 %v593, %v625
    %v630 = vsub.f32 %v621, %v628
    %v631 = vmul.f32 %v629, 1.442695
    %v632 = vpow.pop %v631
    %v633 = vmul.f32 %v630, 1.442695
    %v634 = vpow.pop %v633
    %v635 = vsel %vm181, %v632, 0.0
    %636 = vadd.xlane.f32.xlu0 %v635
    %v637 = vpop.xlane.xlu0 %636
    %v638 = vsel %vm181, %v634, 0.0
    %639 = vadd.xlane.f32.xlu0 %v638
    %v640 = vpop.xlane.xlu0 %639
    %v641 = vrcp.pop %v637
    %v642 = vrcp.pop %v640
    %v643 = vmul.f32 %v632, %v641
    %v644 = vmul.f32 %v634, %v642
    %645 = vrot.lane.b32.xlu0 %v173, 40
    %v646 = vpop.permute.xlu0 %645
    %v649 = vsel %vm181, %v643, 0
    %651 = vmatpush.msra.mxu0 0.0
    %652 = vmatpush.msra.mxu0 0.0
    %653 = vmatpush.msra.mxu0 0.0
    %654 = vmatpush.msra.mxu0 0.0
    %655 = vmatpush.msra.mxu0 0.0
    %656 = vmatpush.msra.mxu0 0.0
    %657 = vmatpush.msra.mxu0 0.0
    %658 = vmatpush.msra.mxu0 0.0
    %659 = vmatpush.msra.mxu0 0.0
    %660 = vmatpush.msra.mxu0 0.0
    %661 = vmatpush.msra.mxu0 0.0
    %662 = vmatpush.msra.mxu0 0.0
    %663 = vmatpush.msra.mxu0 0.0
    %664 = vmatpush.msra.mxu0 0.0
    %665 = vmatpush.msra.mxu0 0.0
    %666 = vmatpush.msra.mxu0 %v646
    %667 = vmatmul.f32.gmra.mxu0 %v649
    %v668 = vpop.f32.mrf.mxu0
    %v669 = vadd.f32 0.0, %v668
    %670 = vdwg.mxu0
    %671 = vrot.lane.b32.xlu0 %v176, 40
    %v672 = vpop.permute.xlu0 %671
    %v675 = vsel %vm181, %v644, 0
    %677 = vmatpush.msra.mxu0 0.0
    %678 = vmatpush.msra.mxu0 0.0
    %679 = vmatpush.msra.mxu0 0.0
    %680 = vmatpush.msra.mxu0 0.0
    %681 = vmatpush.msra.mxu0 0.0
    %682 = vmatpush.msra.mxu0 0.0
    %683 = vmatpush.msra.mxu0 0.0
    %684 = vmatpush.msra.mxu0 0.0
    %685 = vmatpush.msra.mxu0 0.0
    %686 = vmatpush.msra.mxu0 0.0
    %687 = vmatpush.msra.mxu0 0.0
    %688 = vmatpush.msra.mxu0 0.0
    %689 = vmatpush.msra.mxu0 0.0
    %690 = vmatpush.msra.mxu0 0.0
    %691 = vmatpush.msra.mxu0 0.0
    %692 = vmatpush.msra.mxu0 %v672
    %693 = vmatmul.f32.gmra.mxu0 %v675
    %v694 = vpop.f32.mrf.mxu0
    %v695 = vadd.f32 0.0, %v694
    %696 = vdwg.mxu0
    %699 = vrot.lane.b32.xlu0 %v409, 8
    %v700 = vpop.permute.xlu0 %699
    %701 = vrot.lane.b32.xlu0 %v435, 8
    %v702 = vpop.permute.xlu0 %701
    %707 = vrot.lane.b32.xlu0 %v539, 16
    %v708 = vpop.permute.xlu0 %707
    %709 = vrot.lane.b32.xlu0 %v565, 16
    %v710 = vpop.permute.xlu0 %709
    %715 = vrot.lane.b32.xlu0 %v669, 24
    %v716 = vpop.permute.xlu0 %715
    %717 = vrot.lane.b32.xlu0 %v695, 24
    %v718 = vpop.permute.xlu0 %717
    %v721 = vsel %vm181, %v279, %v700
    %v722 = vsel %vm181, %v305, %v702
    %vm723 = vcmask 130048
    %v724 = vsel %vm723, %v721, %v708
    %v725 = vsel %vm723, %v722, %v710
    %vm726 = vcmask 195584
    %v727 = vsel %vm726, %v724, %v716
    %v728 = vsel %vm726, %v725, %v718
    %v730 = vperm.slane %v118, 0
    %v733 = vsel %vm148, %v727, 0
    %v736 = vsel %vm148, %v728, 0
    %738 = vmatpush.msra.mxu0 0.0
    %739 = vmatpush.msra.mxu0 0.0
    %740 = vmatpush.msra.mxu0 0.0
    %741 = vmatpush.msra.mxu0 0.0
    %742 = vmatpush.msra.mxu0 0.0
    %743 = vmatpush.msra.mxu0 0.0
    %744 = vmatpush.msra.mxu0 0.0
    %745 = vmatpush.msra.mxu0 0.0
    %746 = vmatpush.msra.mxu0 0.0
    %747 = vmatpush.msra.mxu0 0.0
    %748 = vmatpush.msra.mxu0 0.0
    %749 = vmatpush.msra.mxu0 0.0
    %750 = vmatpush.msra.mxu0 %v117
    %751 = vmatpush.msra.mxu0 %v116
    %752 = vmatpush.msra.mxu0 %v115
    %753 = vmatpush.msra.mxu0 %v114
    %754 = vmatmul.f32.gmra.mxu0 %v733
    %v755 = vpop.f32.mrf.mxu0
    %v756 = vadd.f32 %v730, %v755
    %757 = vmatmul.f32.gmra.mxu0 %v736
    %v758 = vpop.f32.mrf.mxu0
    %v759 = vadd.f32 %v730, %v758
    %760 = vdwg.mxu0
    %v761 = vadd.f32 %v104, %v756
    %v762 = vadd.f32 %v107, %v759
    %v763 = vsel %vm148, %v761, 0.0
    %764 = vadd.xlane.f32.xlu0 %v763
    %v765 = vpop.xlane.xlu0 %764
    %v766 = vsel %vm148, %v762, 0.0
    %767 = vadd.xlane.f32.xlu0 %v766
    %v768 = vpop.xlane.xlu0 %767
    %v769 = vrcp.pop 32.0
    %v770 = vmul.f32 32.0, %v769
    %v771 = vsub.f32 1.0, %v770
    %v772 = vmul.f32 %v769, %v771
    %v773 = vadd.f32 %v769, %v772
    %vm774 = vweird.f32 %v769
    %v775 = vsel %vm774, %v769, %v773
    %v776 = vmul.f32 %v765, %v775
    %v777 = vmul.f32 %v768, %v775
    %v778 = vmul.f32 %v761, %v761
    %v779 = vmul.f32 %v762, %v762
    %v780 = vsel %vm148, %v778, 0.0
    %781 = vadd.xlane.f32.xlu0 %v780
    %v782 = vpop.xlane.xlu0 %781
    %v783 = vsel %vm148, %v779, 0.0
    %784 = vadd.xlane.f32.xlu0 %v783
    %v785 = vpop.xlane.xlu0 %784
    %v786 = vmul.f32 %v782, %v775
    %v787 = vmul.f32 %v785, %v775
    %v788 = vmul.f32 %v776, %v776
    %v789 = vmul.f32 %v777, %v777
    %v790 = vsub.f32 %v786, %v788
    %v791 = vsub.f32 %v787, %v789
    %v792 = vsub.f32 %v761, %v776
    %v793 = vsub.f32 %v762, %v777
    %v794 = vadd.f32 %v790, 1e-05
    %v795 = vadd.f32 %v791, 1e-05
    %v796 = vrsqrt.pop %v794
    %v797 = vmul.f32 %v796, %v794
    %v798 = vmul.f32 %v797, %v796
    %v799 = vmul.f32 0.5, %v798
    %v800 = vsub.f32 1.5, %v799
    %v801 = vmul.f32 %v796, %v800
    %vm802 = vweird.f32 %v794
    %vm803 = vweird.f32 %v796
    %vm804 = vmor %vm802, %vm803
    %v805 = vsel %vm804, %v796, %v801
    %v806 = vrsqrt.pop %v795
    %v807 = vmul.f32 %v806, %v795
    %v808 = vmul.f32 %v807, %v806
    %v809 = vmul.f32 0.5, %v808
    %v810 = vsub.f32 1.5, %v809
    %v811 = vmul.f32 %v806, %v810
    %vm812 = vweird.f32 %v795
    %vm813 = vweird.f32 %v806
    %vm814 = vmor %vm812, %vm813
    %v815 = vsel %vm814, %v806, %v811
    %v816 = vmul.f32 %v792, %v805
    %v817 = vmul.f32 %v793, %v815
    %v819 = vperm.slane %v119, 0
    %v821 = vmul.f32 %v816, %v819
    %v822 = vmul.f32 %v817, %v819
    %v824 = vperm.slane %v120, 0
    %v826 = vadd.f32 %v821, %v824
    %v827 = vadd.f32 %v822, %v824
    %v829 = vperm.slane %v127, 0
    %v832 = vsel %vm148, %v826, 0
    %v835 = vsel %vm148, %v827, 0
    %837 = vmatpush.msra.mxu0 0.0
    %838 = vmatpush.msra.mxu0 0.0
    %839 = vmatpush.msra.mxu0 0.0
    %840 = vmatpush.msra.mxu0 0.0
    %841 = vmatpush.msra.mxu0 0.0
    %842 = vmatpush.msra.mxu0 0.0
    %843 = vmatpush.msra.mxu0 0.0
    %844 = vmatpush.msra.mxu0 0.0
    %845 = vmatpush.msra.mxu0 0.0
    %846 = vmatpush.msra.mxu0 0.0
    %847 = vmatpush.msra.mxu0 0.0
    %848 = vmatpush.msra.mxu0 0.0
    %849 = vmatpush.msra.mxu0 %v126
    %850 = vmatpush.msra.mxu0 %v125
    %851 = vmatpush.msra.mxu0 %v124
    %852 = vmatpush.msra.mxu0 %v123
    %853 = vmatmul.f32.gmra.mxu0 %v832
    %v854 = vpop.f32.mrf.mxu0
    %v855 = vadd.f32 %v829, %v854
    %856 = vmatmul.f32.gmra.mxu0 %v835
    %v857 = vpop.f32.mrf.mxu0
    %v858 = vadd.f32 %v829, %v857
    %859 = vdwg.mxu0
    %v860 = vmax.f32 %v855, 0.0
    %v861 = vmax.f32 %v858, 0.0
    %v863 = vperm.slane %v144, 0
    %865 = vmatpush.msra.mxu0 %v143
    %866 = vmatpush.msra.mxu0 %v142
    %867 = vmatpush.msra.mxu0 %v141
    %868 = vmatpush.msra.mxu0 %v140
    %869 = vmatpush.msra.mxu0 %v139
    %870 = vmatpush.msra.mxu0 %v138
    %871 = vmatpush.msra.mxu0 %v137
    %872 = vmatpush.msra.mxu0 %v136
    %873 = vmatpush.msra.mxu0 %v135
    %874 = vmatpush.msra.mxu0 %v134
    %875 = vmatpush.msra.mxu0 %v133
    %876 = vmatpush.msra.mxu0 %v132
    %877 = vmatpush.msra.mxu0 %v131
    %878 = vmatpush.msra.mxu0 %v130
    %879 = vmatpush.msra.mxu0 %v129
    %880 = vmatpush.msra.mxu0 %v128
    %881 = vmatmul.f32.gmra.mxu0 %v860
    %v882 = vpop.f32.mrf.mxu0
    %v883 = vadd.f32 %v863, %v882
    %884 = vmatmul.f32.gmra.mxu0 %v861
    %v885 = vpop.f32.mrf.mxu0
    %v886 = vadd.f32 %v863, %v885
    %887 = vdwg.mxu0
    %v888 = vadd.f32 %v826, %v883
    %v889 = vadd.f32 %v827, %v886
    %v890 = vsel %vm148, %v888, 0.0
    %891 = vadd.xlane.f32.xlu0 %v890
    %v892 = vpop.xlane.xlu0 %891
    %v893 = vsel %vm148, %v889, 0.0
    %894 = vadd.xlane.f32.xlu0 %v893
    %v895 = vpop.xlane.xlu0 %894
    %v896 = vmul.f32 %v892, %v775
    %v897 = vmul.f32 %v895, %v775
    %v898 = vmul.f32 %v888, %v888
    %v899 = vmul.f32 %v889, %v889
    %v900 = vsel %vm148, %v898, 0.0
    %901 = vadd.xlane.f32.xlu0 %v900
    %v902 = vpop.xlane.xlu0 %901
    %v903 = vsel %vm148, %v899, 0.0
    %904 = vadd.xlane.f32.xlu0 %v903
    %v905 = vpop.xlane.xlu0 %904
    %v906 = vmul.f32 %v902, %v775
    %v907 = vmul.f32 %v905, %v775
    %v908 = vmul.f32 %v896, %v896
    %v909 = vmul.f32 %v897, %v897
    %v910 = vsub.f32 %v906, %v908
    %v911 = vsub.f32 %v907, %v909
    %v912 = vsub.f32 %v888, %v896
    %v913 = vsub.f32 %v889, %v897
    %v914 = vadd.f32 %v910, 1e-05
    %v915 = vadd.f32 %v911, 1e-05
    %v916 = vrsqrt.pop %v914
    %v917 = vmul.f32 %v916, %v914
    %v918 = vmul.f32 %v917, %v916
    %v919 = vmul.f32 0.5, %v918
    %v920 = vsub.f32 1.5, %v919
    %v921 = vmul.f32 %v916, %v920
    %vm922 = vweird.f32 %v914
    %vm923 = vweird.f32 %v916
    %vm924 = vmor %vm922, %vm923
    %v925 = vsel %vm924, %v916, %v921
    %v926 = vrsqrt.pop %v915
    %v927 = vmul.f32 %v926, %v915
    %v928 = vmul.f32 %v927, %v926
    %v929 = vmul.f32 0.5, %v928
    %v930 = vsub.f32 1.5, %v929
    %v931 = vmul.f32 %v926, %v930
    %vm932 = vweird.f32 %v915
    %vm933 = vweird.f32 %v926
    %vm934 = vmor %vm932, %vm933
    %v935 = vsel %vm934, %v926, %v931
    %v936 = vmul.f32 %v912, %v925
    %v937 = vmul.f32 %v913, %v935
    %v939 = vperm.slane %v121, 0
    %v941 = vmul.f32 %v936, %v939
    %v942 = vmul.f32 %v937, %v939
    %v944 = vperm.slane %v122, 0
    %v946 = vadd.f32 %v941, %v944
    %v947 = vadd.f32 %v942, %v944
    %s948 = scalar_lea.vmem %s4, 32
    %v949 = vld [vmem:[%s948] sm:$0xff]
    %v950 = vld [vmem:[%s948 + $0x8] sm:$0xff]
    %v951 = vld [vmem:[%s948 + $0x10] sm:$0xff]
    %v952 = vld [vmem:[%s948 + $0x18] sm:$0xff]
    %s953 = scalar_lea.vmem %s5, 1
    %v954 = vld [vmem:[%s953] sm:$0x1]
    %s955 = scalar_lea.vmem %s6, 32
    %v956 = vld [vmem:[%s955] sm:$0xff]
    %v957 = vld [vmem:[%s955 + $0x8] sm:$0xff]
    %v958 = vld [vmem:[%s955 + $0x10] sm:$0xff]
    %v959 = vld [vmem:[%s955 + $0x18] sm:$0xff]
    %s960 = scalar_lea.vmem %s7, 1
    %v961 = vld [vmem:[%s960] sm:$0x1]
    %s962 = scalar_lea.vmem %s8, 1
    %v963 = vld [vmem:[%s962] sm:$0x1]
    %s964 = scalar_lea.vmem %s9, 1
    %v965 = vld [vmem:[%s964] sm:$0x1]
    %s966 = scalar_lea.vmem %s10, 1
    %v967 = vld [vmem:[%s966] sm:$0x1]
    %s968 = scalar_lea.vmem %s11, 1
    %v969 = vld [vmem:[%s968] sm:$0x1]
    %s970 = scalar_lea.vmem %s12, 32
    %v971 = vld [vmem:[%s970] sm:$0xff]
    %v972 = vld [vmem:[%s970 + $0x8] sm:$0xff]
    %v973 = vld [vmem:[%s970 + $0x10] sm:$0xff]
    %v974 = vld [vmem:[%s970 + $0x18] sm:$0xff]
    %s975 = scalar_lea.vmem %s13, 1
    %v976 = vld [vmem:[%s975] sm:$0x1]
    %s977 = scalar_lea.vmem %s14, 128
    %v978 = vld [vmem:[%s977] sm:$0xff]
    %v979 = vld [vmem:[%s977 + $0x8] sm:$0xff]
    %v980 = vld [vmem:[%s977 + $0x10] sm:$0xff]
    %v981 = vld [vmem:[%s977 + $0x18] sm:$0xff]
    %v982 = vld [vmem:[%s977 + $0x20] sm:$0xff]
    %v983 = vld [vmem:[%s977 + $0x28] sm:$0xff]
    %v984 = vld [vmem:[%s977 + $0x30] sm:$0xff]
    %v985 = vld [vmem:[%s977 + $0x38] sm:$0xff]
    %v986 = vld [vmem:[%s977 + $0x40] sm:$0xff]
    %v987 = vld [vmem:[%s977 + $0x48] sm:$0xff]
    %v988 = vld [vmem:[%s977 + $0x50] sm:$0xff]
    %v989 = vld [vmem:[%s977 + $0x58] sm:$0xff]
    %v990 = vld [vmem:[%s977 + $0x60] sm:$0xff]
    %v991 = vld [vmem:[%s977 + $0x68] sm:$0xff]
    %v992 = vld [vmem:[%s977 + $0x70] sm:$0xff]
    %v993 = vld [vmem:[%s977 + $0x78] sm:$0xff]
    %s994 = scalar_lea.vmem %s15, 1
    %v995 = vld [vmem:[%s994] sm:$0x1]
    %v997 = vperm.slane %v954, 0
    %v1000 = vsel %vm148, %v946, 0
    %v1003 = vsel %vm148, %v947, 0
    %1005 = vmatpush.msra.mxu0 0.0
    %1006 = vmatpush.msra.mxu0 0.0
    %1007 = vmatpush.msra.mxu0 0.0
    %1008 = vmatpush.msra.mxu0 0.0
    %1009 = vmatpush.msra.mxu0 0.0
    %1010 = vmatpush.msra.mxu0 0.0
    %1011 = vmatpush.msra.mxu0 0.0
    %1012 = vmatpush.msra.mxu0 0.0
    %1013 = vmatpush.msra.mxu0 0.0
    %1014 = vmatpush.msra.mxu0 0.0
    %1015 = vmatpush.msra.mxu0 0.0
    %1016 = vmatpush.msra.mxu0 0.0
    %1017 = vmatpush.msra.mxu0 %v952
    %1018 = vmatpush.msra.mxu0 %v951
    %1019 = vmatpush.msra.mxu0 %v950
    %1020 = vmatpush.msra.mxu0 %v949
    %1021 = vmatmul.f32.gmra.mxu0 %v1000
    %v1022 = vpop.f32.mrf.mxu0
    %v1023 = vadd.f32 %v997, %v1022
    %1024 = vmatmul.f32.gmra.mxu0 %v1003
    %v1025 = vpop.f32.mrf.mxu0
    %v1026 = vadd.f32 %v997, %v1025
    %1027 = vdwg.mxu0
    %1029 = vrot.lane.b32.xlu0 %v1023, 96
    %v1030 = vpop.permute.xlu0 %1029
    %v1031 = vsel %vm181, %v1023, 0
    %v1033 = vsel %vm181, %v1030, 0
    %1035 = vmatpush.xpose.msra.mxu0 0.0
    %1036 = vmatpush.xpose.msra.mxu0 0.0
    %1037 = vmatpush.xpose.msra.mxu0 0.0
    %1038 = vmatpush.xpose.msra.mxu0 0.0
    %1039 = vmatpush.xpose.msra.mxu0 0.0
    %1040 = vmatpush.xpose.msra.mxu0 0.0
    %1041 = vmatpush.xpose.msra.mxu0 0.0
    %1042 = vmatpush.xpose.msra.mxu0 0.0
    %1043 = vmatpush.xpose.msra.mxu0 0.0
    %1044 = vmatpush.xpose.msra.mxu0 0.0
    %1045 = vmatpush.xpose.msra.mxu0 0.0
    %1046 = vmatpush.xpose.msra.mxu0 0.0
    %1047 = vmatpush.xpose.msra.mxu0 0.0
    %1048 = vmatpush.xpose.msra.mxu0 0.0
    %1049 = vmatpush.xpose.msra.mxu0 0.0
    %1050 = vmatpush.xpose.msra.mxu0 %v1033
    %1051 = vmatmul.f32.gmra.mxu0 %v1031
    %v1052 = vpop.f32.mrf.mxu0
    %v1053 = vadd.f32 0.0, %v1052
    %1054 = vdwg.mxu0
    %1056 = vrot.lane.b32.xlu0 %v1026, 96
    %v1057 = vpop.permute.xlu0 %1056
    %v1058 = vsel %vm181, %v1026, 0
    %v1060 = vsel %vm181, %v1057, 0
    %1062 = vmatpush.xpose.msra.mxu0 0.0
    %1063 = vmatpush.xpose.msra.mxu0 0.0
    %1064 = vmatpush.xpose.msra.mxu0 0.0
    %1065 = vmatpush.xpose.msra.mxu0 0.0
    %1066 = vmatpush.xpose.msra.mxu0 0.0
    %1067 = vmatpush.xpose.msra.mxu0 0.0
    %1068 = vmatpush.xpose.msra.mxu0 0.0
    %1069 = vmatpush.xpose.msra.mxu0 0.0
    %1070 = vmatpush.xpose.msra.mxu0 0.0
    %1071 = vmatpush.xpose.msra.mxu0 0.0
    %1072 = vmatpush.xpose.msra.mxu0 0.0
    %1073 = vmatpush.xpose.msra.mxu0 0.0
    %1074 = vmatpush.xpose.msra.mxu0 0.0
    %1075 = vmatpush.xpose.msra.mxu0 0.0
    %1076 = vmatpush.xpose.msra.mxu0 0.0
    %1077 = vmatpush.xpose.msra.mxu0 %v1060
    %1078 = vmatmul.f32.gmra.mxu0 %v1058
    %v1079 = vpop.f32.mrf.mxu0
    %v1080 = vadd.f32 0.0, %v1079
    %1081 = vdwg.mxu0
    %v1082 = vsel %vm181, %v1053, -inf
    %1083 = vmax.xlane.f32.xlu0 %v1082
    %v1084 = vpop.xlane.xlu0 %1083
    %v1085 = vsel %vm181, %v1080, -inf
    %1086 = vmax.xlane.f32.xlu0 %v1085
    %v1087 = vpop.xlane.xlu0 %1086
    %v1088 = vsub.f32 %v1053, %v1084
    %v1089 = vsub.f32 %v1080, %v1087
    %v1090 = vmul.f32 %v1088, 1.442695
    %v1091 = vpow.pop %v1090
    %v1092 = vmul.f32 %v1089, 1.442695
    %v1093 = vpow.pop %v1092
    %v1094 = vsel %vm181, %v1091, 0.0
    %1095 = vadd.xlane.f32.xlu0 %v1094
    %v1096 = vpop.xlane.xlu0 %1095
    %v1097 = vsel %vm181, %v1093, 0.0
    %1098 = vadd.xlane.f32.xlu0 %v1097
    %v1099 = vpop.xlane.xlu0 %1098
    %v1100 = vrcp.pop %v1096
    %v1101 = vrcp.pop %v1099
    %v1102 = vmul.f32 %v1091, %v1100
    %v1103 = vmul.f32 %v1093, %v1101
    %1104 = vrot.lane.b32.xlu0 %v1023, 64
    %v1105 = vpop.permute.xlu0 %1104
    %v1108 = vsel %vm181, %v1102, 0
    %1110 = vmatpush.msra.mxu0 0.0
    %1111 = vmatpush.msra.mxu0 0.0
    %1112 = vmatpush.msra.mxu0 0.0
    %1113 = vmatpush.msra.mxu0 0.0
    %1114 = vmatpush.msra.mxu0 0.0
    %1115 = vmatpush.msra.mxu0 0.0
    %1116 = vmatpush.msra.mxu0 0.0
    %1117 = vmatpush.msra.mxu0 0.0
    %1118 = vmatpush.msra.mxu0 0.0
    %1119 = vmatpush.msra.mxu0 0.0
    %1120 = vmatpush.msra.mxu0 0.0
    %1121 = vmatpush.msra.mxu0 0.0
    %1122 = vmatpush.msra.mxu0 0.0
    %1123 = vmatpush.msra.mxu0 0.0
    %1124 = vmatpush.msra.mxu0 0.0
    %1125 = vmatpush.msra.mxu0 %v1105
    %1126 = vmatmul.f32.gmra.mxu0 %v1108
    %v1127 = vpop.f32.mrf.mxu0
    %v1128 = vadd.f32 0.0, %v1127
    %1129 = vdwg.mxu0
    %1130 = vrot.lane.b32.xlu0 %v1026, 64
    %v1131 = vpop.permute.xlu0 %1130
    %v1134 = vsel %vm181, %v1103, 0
    %1136 = vmatpush.msra.mxu0 0.0
    %1137 = vmatpush.msra.mxu0 0.0
    %1138 = vmatpush.msra.mxu0 0.0
    %1139 = vmatpush.msra.mxu0 0.0
    %1140 = vmatpush.msra.mxu0 0.0
    %1141 = vmatpush.msra.mxu0 0.0
    %1142 = vmatpush.msra.mxu0 0.0
    %1143 = vmatpush.msra.mxu0 0.0
    %1144 = vmatpush.msra.mxu0 0.0
    %1145 = vmatpush.msra.mxu0 0.0
    %1146 = vmatpush.msra.mxu0 0.0
    %1147 = vmatpush.msra.mxu0 0.0
    %1148 = vmatpush.msra.mxu0 0.0
    %1149 = vmatpush.msra.mxu0 0.0
    %1150 = vmatpush.msra.mxu0 0.0
    %1151 = vmatpush.msra.mxu0 %v1131
    %1152 = vmatmul.f32.gmra.mxu0 %v1134
    %v1153 = vpop.f32.mrf.mxu0
    %v1154 = vadd.f32 0.0, %v1153
    %1155 = vdwg.mxu0
    %1156 = vrot.lane.b32.xlu0 %v1023, 120
    %v1157 = vpop.permute.xlu0 %1156
    %1158 = vrot.lane.b32.xlu0 %v1023, 88
    %v1159 = vpop.permute.xlu0 %1158
    %v1160 = vsel %vm181, %v1157, 0
    %v1162 = vsel %vm181, %v1159, 0
    %1164 = vmatpush.xpose.msra.mxu0 0.0
    %1165 = vmatpush.xpose.msra.mxu0 0.0
    %1166 = vmatpush.xpose.msra.mxu0 0.0
    %1167 = vmatpush.xpose.msra.mxu0 0.0
    %1168 = vmatpush.xpose.msra.mxu0 0.0
    %1169 = vmatpush.xpose.msra.mxu0 0.0
    %1170 = vmatpush.xpose.msra.mxu0 0.0
    %1171 = vmatpush.xpose.msra.mxu0 0.0
    %1172 = vmatpush.xpose.msra.mxu0 0.0
    %1173 = vmatpush.xpose.msra.mxu0 0.0
    %1174 = vmatpush.xpose.msra.mxu0 0.0
    %1175 = vmatpush.xpose.msra.mxu0 0.0
    %1176 = vmatpush.xpose.msra.mxu0 0.0
    %1177 = vmatpush.xpose.msra.mxu0 0.0
    %1178 = vmatpush.xpose.msra.mxu0 0.0
    %1179 = vmatpush.xpose.msra.mxu0 %v1162
    %1180 = vmatmul.f32.gmra.mxu0 %v1160
    %v1181 = vpop.f32.mrf.mxu0
    %v1182 = vadd.f32 0.0, %v1181
    %1183 = vdwg.mxu0
    %1184 = vrot.lane.b32.xlu0 %v1026, 120
    %v1185 = vpop.permute.xlu0 %1184
    %1186 = vrot.lane.b32.xlu0 %v1026, 88
    %v1187 = vpop.permute.xlu0 %1186
    %v1188 = vsel %vm181, %v1185, 0
    %v1190 = vsel %vm181, %v1187, 0
    %1192 = vmatpush.xpose.msra.mxu0 0.0
    %1193 = vmatpush.xpose.msra.mxu0 0.0
    %1194 = vmatpush.xpose.msra.mxu0 0.0
    %1195 = vmatpush.xpose.msra.mxu0 0.0
    %1196 = vmatpush.xpose.msra.mxu0 0.0
    %1197 = vmatpush.xpose.msra.mxu0 0.0
    %1198 = vmatpush.xpose.msra.mxu0 0.0
    %1199 = vmatpush.xpose.msra.mxu0 0.0
    %1200 = vmatpush.xpose.msra.mxu0 0.0
    %1201 = vmatpush.xpose.msra.mxu0 0.0
    %1202 = vmatpush.xpose.msra.mxu0 0.0
    %1203 = vmatpush.xpose.msra.mxu0 0.0
    %1204 = vmatpush.xpose.msra.mxu0 0.0
    %1205 = vmatpush.xpose.msra.mxu0 0.0
    %1206 = vmatpush.xpose.msra.mxu0 0.0
    %1207 = vmatpush.xpose.msra.mxu0 %v1190
    %1208 = vmatmul.f32.gmra.mxu0 %v1188
    %v1209 = vpop.f32.mrf.mxu0
    %v1210 = vadd.f32 0.0, %v1209
    %1211 = vdwg.mxu0
    %v1212 = vsel %vm181, %v1182, -inf
    %1213 = vmax.xlane.f32.xlu0 %v1212
    %v1214 = vpop.xlane.xlu0 %1213
    %v1215 = vsel %vm181, %v1210, -inf
    %1216 = vmax.xlane.f32.xlu0 %v1215
    %v1217 = vpop.xlane.xlu0 %1216
    %v1218 = vsub.f32 %v1182, %v1214
    %v1219 = vsub.f32 %v1210, %v1217
    %v1220 = vmul.f32 %v1218, 1.442695
    %v1221 = vpow.pop %v1220
    %v1222 = vmul.f32 %v1219, 1.442695
    %v1223 = vpow.pop %v1222
    %v1224 = vsel %vm181, %v1221, 0.0
    %1225 = vadd.xlane.f32.xlu0 %v1224
    %v1226 = vpop.xlane.xlu0 %1225
    %v1227 = vsel %vm181, %v1223, 0.0
    %1228 = vadd.xlane.f32.xlu0 %v1227
    %v1229 = vpop.xlane.xlu0 %1228
    %v1230 = vrcp.pop %v1226
    %v1231 = vrcp.pop %v1229
    %v1232 = vmul.f32 %v1221, %v1230
    %v1233 = vmul.f32 %v1223, %v1231
    %1234 = vrot.lane.b32.xlu0 %v1023, 56
    %v1235 = vpop.permute.xlu0 %1234
    %v1238 = vsel %vm181, %v1232, 0
    %1240 = vmatpush.msra.mxu0 0.0
    %1241 = vmatpush.msra.mxu0 0.0
    %1242 = vmatpush.msra.mxu0 0.0
    %1243 = vmatpush.msra.mxu0 0.0
    %1244 = vmatpush.msra.mxu0 0.0
    %1245 = vmatpush.msra.mxu0 0.0
    %1246 = vmatpush.msra.mxu0 0.0
    %1247 = vmatpush.msra.mxu0 0.0
    %1248 = vmatpush.msra.mxu0 0.0
    %1249 = vmatpush.msra.mxu0 0.0
    %1250 = vmatpush.msra.mxu0 0.0
    %1251 = vmatpush.msra.mxu0 0.0
    %1252 = vmatpush.msra.mxu0 0.0
    %1253 = vmatpush.msra.mxu0 0.0
    %1254 = vmatpush.msra.mxu0 0.0
    %1255 = vmatpush.msra.mxu0 %v1235
    %1256 = vmatmul.f32.gmra.mxu0 %v1238
    %v1257 = vpop.f32.mrf.mxu0
    %v1258 = vadd.f32 0.0, %v1257
    %1259 = vdwg.mxu0
    %1260 = vrot.lane.b32.xlu0 %v1026, 56
    %v1261 = vpop.permute.xlu0 %1260
    %v1264 = vsel %vm181, %v1233, 0
    %1266 = vmatpush.msra.mxu0 0.0
    %1267 = vmatpush.msra.mxu0 0.0
    %1268 = vmatpush.msra.mxu0 0.0
    %1269 = vmatpush.msra.mxu0 0.0
    %1270 = vmatpush.msra.mxu0 0.0
    %1271 = vmatpush.msra.mxu0 0.0
    %1272 = vmatpush.msra.mxu0 0.0
    %1273 = vmatpush.msra.mxu0 0.0
    %1274 = vmatpush.msra.mxu0 0.0
    %1275 = vmatpush.msra.mxu0 0.0
    %1276 = vmatpush.msra.mxu0 0.0
    %1277 = vmatpush.msra.mxu0 0.0
    %1278 = vmatpush.msra.mxu0 0.0
    %1279 = vmatpush.msra.mxu0 0.0
    %1280 = vmatpush.msra.mxu0 0.0
    %1281 = vmatpush.msra.mxu0 %v1261
    %1282 = vmatmul.f32.gmra.mxu0 %v1264
    %v1283 = vpop.f32.mrf.mxu0
    %v1284 = vadd.f32 0.0, %v1283
    %1285 = vdwg.mxu0
    %1286 = vrot.lane.b32.xlu0 %v1023, 112
    %v1287 = vpop.permute.xlu0 %1286
    %1288 = vrot.lane.b32.xlu0 %v1023, 80
    %v1289 = vpop.permute.xlu0 %1288
    %v1290 = vsel %vm181, %v1287, 0
    %v1292 = vsel %vm181, %v1289, 0
    %1294 = vmatpush.xpose.msra.mxu0 0.0
    %1295 = vmatpush.xpose.msra.mxu0 0.0
    %1296 = vmatpush.xpose.msra.mxu0 0.0
    %1297 = vmatpush.xpose.msra.mxu0 0.0
    %1298 = vmatpush.xpose.msra.mxu0 0.0
    %1299 = vmatpush.xpose.msra.mxu0 0.0
    %1300 = vmatpush.xpose.msra.mxu0 0.0
    %1301 = vmatpush.xpose.msra.mxu0 0.0
    %1302 = vmatpush.xpose.msra.mxu0 0.0
    %1303 = vmatpush.xpose.msra.mxu0 0.0
    %1304 = vmatpush.xpose.msra.mxu0 0.0
    %1305 = vmatpush.xpose.msra.mxu0 0.0
    %1306 = vmatpush.xpose.msra.mxu0 0.0
    %1307 = vmatpush.xpose.msra.mxu0 0.0
    %1308 = vmatpush.xpose.msra.mxu0 0.0
    %1309 = vmatpush.xpose.msra.mxu0 %v1292
    %1310 = vmatmul.f32.gmra.mxu0 %v1290
    %v1311 = vpop.f32.mrf.mxu0
    %v1312 = vadd.f32 0.0, %v1311
    %1313 = vdwg.mxu0
    %1314 = vrot.lane.b32.xlu0 %v1026, 112
    %v1315 = vpop.permute.xlu0 %1314
    %1316 = vrot.lane.b32.xlu0 %v1026, 80
    %v1317 = vpop.permute.xlu0 %1316
    %v1318 = vsel %vm181, %v1315, 0
    %v1320 = vsel %vm181, %v1317, 0
    %1322 = vmatpush.xpose.msra.mxu0 0.0
    %1323 = vmatpush.xpose.msra.mxu0 0.0
    %1324 = vmatpush.xpose.msra.mxu0 0.0
    %1325 = vmatpush.xpose.msra.mxu0 0.0
    %1326 = vmatpush.xpose.msra.mxu0 0.0
    %1327 = vmatpush.xpose.msra.mxu0 0.0
    %1328 = vmatpush.xpose.msra.mxu0 0.0
    %1329 = vmatpush.xpose.msra.mxu0 0.0
    %1330 = vmatpush.xpose.msra.mxu0 0.0
    %1331 = vmatpush.xpose.msra.mxu0 0.0
    %1332 = vmatpush.xpose.msra.mxu0 0.0
    %1333 = vmatpush.xpose.msra.mxu0 0.0
    %1334 = vmatpush.xpose.msra.mxu0 0.0
    %1335 = vmatpush.xpose.msra.mxu0 0.0
    %1336 = vmatpush.xpose.msra.mxu0 0.0
    %1337 = vmatpush.xpose.msra.mxu0 %v1320
    %1338 = vmatmul.f32.gmra.mxu0 %v1318
    %v1339 = vpop.f32.mrf.mxu0
    %v1340 = vadd.f32 0.0, %v1339
    %1341 = vdwg.mxu0
    %v1342 = vsel %vm181, %v1312, -inf
    %1343 = vmax.xlane.f32.xlu0 %v1342
    %v1344 = vpop.xlane.xlu0 %1343
    %v1345 = vsel %vm181, %v1340, -inf
    %1346 = vmax.xlane.f32.xlu0 %v1345
    %v1347 = vpop.xlane.xlu0 %1346
    %v1348 = vsub.f32 %v1312, %v1344
    %v1349 = vsub.f32 %v1340, %v1347
    %v1350 = vmul.f32 %v1348, 1.442695
    %v1351 = vpow.pop %v1350
    %v1352 = vmul.f32 %v1349, 1.442695
    %v1353 = vpow.pop %v1352
    %v1354 = vsel %vm181, %v1351, 0.0
    %1355 = vadd.xlane.f32.xlu0 %v1354
    %v1356 = vpop.xlane.xlu0 %1355
    %v1357 = vsel %vm181, %v1353, 0.0
    %1358 = vadd.xlane.f32.xlu0 %v1357
    %v1359 = vpop.xlane.xlu0 %1358
    %v1360 = vrcp.pop %v1356
    %v1361 = vrcp.pop %v1359
    %v1362 = vmul.f32 %v1351, %v1360
    %v1363 = vmul.f32 %v1353, %v1361
    %1364 = vrot.lane.b32.xlu0 %v1023, 48
    %v1365 = vpop.permute.xlu0 %1364
    %v1368 = vsel %vm181, %v1362, 0
    %1370 = vmatpush.msra.mxu0 0.0
    %1371 = vmatpush.msra.mxu0 0.0
    %1372 = vmatpush.msra.mxu0 0.0
    %1373 = vmatpush.msra.mxu0 0.0
    %1374 = vmatpush.msra.mxu0 0.0
    %1375 = vmatpush.msra.mxu0 0.0
    %1376 = vmatpush.msra.mxu0 0.0
    %1377 = vmatpush.msra.mxu0 0.0
    %1378 = vmatpush.msra.mxu0 0.0
    %1379 = vmatpush.msra.mxu0 0.0
    %1380 = vmatpush.msra.mxu0 0.0
    %1381 = vmatpush.msra.mxu0 0.0
    %1382 = vmatpush.msra.mxu0 0.0
    %1383 = vmatpush.msra.mxu0 0.0
    %1384 = vmatpush.msra.mxu0 0.0
    %1385 = vmatpush.msra.mxu0 %v1365
    %1386 = vmatmul.f32.gmra.mxu0 %v1368
    %v1387 = vpop.f32.mrf.mxu0
    %v1388 = vadd.f32 0.0, %v1387
    %1389 = vdwg.mxu0
    %1390 = vrot.lane.b32.xlu0 %v1026, 48
    %v1391 = vpop.permute.xlu0 %1390
    %v1394 = vsel %vm181, %v1363, 0
    %1396 = vmatpush.msra.mxu0 0.0
    %1397 = vmatpush.msra.mxu0 0.0
    %1398 = vmatpush.msra.mxu0 0.0
    %1399 = vmatpush.msra.mxu0 0.0
    %1400 = vmatpush.msra.mxu0 0.0
    %1401 = vmatpush.msra.mxu0 0.0
    %1402 = vmatpush.msra.mxu0 0.0
    %1403 = vmatpush.msra.mxu0 0.0
    %1404 = vmatpush.msra.mxu0 0.0
    %1405 = vmatpush.msra.mxu0 0.0
    %1406 = vmatpush.msra.mxu0 0.0
    %1407 = vmatpush.msra.mxu0 0.0
    %1408 = vmatpush.msra.mxu0 0.0
    %1409 = vmatpush.msra.mxu0 0.0
    %1410 = vmatpush.msra.mxu0 0.0
    %1411 = vmatpush.msra.mxu0 %v1391
    %1412 = vmatmul.f32.gmra.mxu0 %v1394
    %v1413 = vpop.f32.mrf.mxu0
    %v1414 = vadd.f32 0.0, %v1413
    %1415 = vdwg.mxu0
    %1416 = vrot.lane.b32.xlu0 %v1023, 104
    %v1417 = vpop.permute.xlu0 %1416
    %1418 = vrot.lane.b32.xlu0 %v1023, 72
    %v1419 = vpop.permute.xlu0 %1418
    %v1420 = vsel %vm181, %v1417, 0
    %v1422 = vsel %vm181, %v1419, 0
    %1424 = vmatpush.xpose.msra.mxu0 0.0
    %1425 = vmatpush.xpose.msra.mxu0 0.0
    %1426 = vmatpush.xpose.msra.mxu0 0.0
    %1427 = vmatpush.xpose.msra.mxu0 0.0
    %1428 = vmatpush.xpose.msra.mxu0 0.0
    %1429 = vmatpush.xpose.msra.mxu0 0.0
    %1430 = vmatpush.xpose.msra.mxu0 0.0
    %1431 = vmatpush.xpose.msra.mxu0 0.0
    %1432 = vmatpush.xpose.msra.mxu0 0.0
    %1433 = vmatpush.xpose.msra.mxu0 0.0
    %1434 = vmatpush.xpose.msra.mxu0 0.0
    %1435 = vmatpush.xpose.msra.mxu0 0.0
    %1436 = vmatpush.xpose.msra.mxu0 0.0
    %1437 = vmatpush.xpose.msra.mxu0 0.0
    %1438 = vmatpush.xpose.msra.mxu0 0.0
    %1439 = vmatpush.xpose.msra.mxu0 %v1422
    %1440 = vmatmul.f32.gmra.mxu0 %v1420
    %v1441 = vpop.f32.mrf.mxu0
    %v1442 = vadd.f32 0.0, %v1441
    %1443 = vdwg.mxu0
    %1444 = vrot.lane.b32.xlu0 %v1026, 104
    %v1445 = vpop.permute.xlu0 %1444
    %1446 = vrot.lane.b32.xlu0 %v1026, 72
    %v1447 = vpop.permute.xlu0 %1446
    %v1448 = vsel %vm181, %v1445, 0
    %v1450 = vsel %vm181, %v1447, 0
    %1452 = vmatpush.xpose.msra.mxu0 0.0
    %1453 = vmatpush.xpose.msra.mxu0 0.0
    %1454 = vmatpush.xpose.msra.mxu0 0.0
    %1455 = vmatpush.xpose.msra.mxu0 0.0
    %1456 = vmatpush.xpose.msra.mxu0 0.0
    %1457 = vmatpush.xpose.msra.mxu0 0.0
    %1458 = vmatpush.xpose.msra.mxu0 0.0
    %1459 = vmatpush.xpose.msra.mxu0 0.0
    %1460 = vmatpush.xpose.msra.mxu0 0.0
    %1461 = vmatpush.xpose.msra.mxu0 0.0
    %1462 = vmatpush.xpose.msra.mxu0 0.0
    %1463 = vmatpush.xpose.msra.mxu0 0.0
    %1464 = vmatpush.xpose.msra.mxu0 0.0
    %1465 = vmatpush.xpose.msra.mxu0 0.0
    %1466 = vmatpush.xpose.msra.mxu0 0.0
    %1467 = vmatpush.xpose.msra.mxu0 %v1450
    %1468 = vmatmul.f32.gmra.mxu0 %v1448
    %v1469 = vpop.f32.mrf.mxu0
    %v1470 = vadd.f32 0.0, %v1469
    %1471 = vdwg.mxu0
    %v1472 = vsel %vm181, %v1442, -inf
    %1473 = vmax.xlane.f32.xlu0 %v1472
    %v1474 = vpop.xlane.xlu0 %1473
    %v1475 = vsel %vm181, %v1470, -inf
    %1476 = vmax.xlane.f32.xlu0 %v1475
    %v1477 = vpop.xlane.xlu0 %1476
    %v1478 = vsub.f32 %v1442, %v1474
    %v1479 = vsub.f32 %v1470, %v1477
    %v1480 = vmul.f32 %v1478, 1.442695
    %v1481 = vpow.pop %v1480
    %v1482 = vmul.f32 %v1479, 1.442695
    %v1483 = vpow.pop %v1482
    %v1484 = vsel %vm181, %v1481, 0.0
    %1485 = vadd.xlane.f32.xlu0 %v1484
    %v1486 = vpop.xlane.xlu0 %1485
    %v1487 = vsel %vm181, %v1483, 0.0
    %1488 = vadd.xlane.f32.xlu0 %v1487
    %v1489 = vpop.xlane.xlu0 %1488
    %v1490 = vrcp.pop %v1486
    %v1491 = vrcp.pop %v1489
    %v1492 = vmul.f32 %v1481, %v1490
    %v1493 = vmul.f32 %v1483, %v1491
    %1494 = vrot.lane.b32.xlu0 %v1023, 40
    %v1495 = vpop.permute.xlu0 %1494
    %v1498 = vsel %vm181, %v1492, 0
    %1500 = vmatpush.msra.mxu0 0.0
    %1501 = vmatpush.msra.mxu0 0.0
    %1502 = vmatpush.msra.mxu0 0.0
    %1503 = vmatpush.msra.mxu0 0.0
    %1504 = vmatpush.msra.mxu0 0.0
    %1505 = vmatpush.msra.mxu0 0.0
    %1506 = vmatpush.msra.mxu0 0.0
    %1507 = vmatpush.msra.mxu0 0.0
    %1508 = vmatpush.msra.mxu0 0.0
    %1509 = vmatpush.msra.mxu0 0.0
    %1510 = vmatpush.msra.mxu0 0.0
    %1511 = vmatpush.msra.mxu0 0.0
    %1512 = vmatpush.msra.mxu0 0.0
    %1513 = vmatpush.msra.mxu0 0.0
    %1514 = vmatpush.msra.mxu0 0.0
    %1515 = vmatpush.msra.mxu0 %v1495
    %1516 = vmatmul.f32.gmra.mxu0 %v1498
    %v1517 = vpop.f32.mrf.mxu0
    %v1518 = vadd.f32 0.0, %v1517
    %1519 = vdwg.mxu0
    %1520 = vrot.lane.b32.xlu0 %v1026, 40
    %v1521 = vpop.permute.xlu0 %1520
    %v1524 = vsel %vm181, %v1493, 0
    %1526 = vmatpush.msra.mxu0 0.0
    %1527 = vmatpush.msra.mxu0 0.0
    %1528 = vmatpush.msra.mxu0 0.0
    %1529 = vmatpush.msra.mxu0 0.0
    %1530 = vmatpush.msra.mxu0 0.0
    %1531 = vmatpush.msra.mxu0 0.0
    %1532 = vmatpush.msra.mxu0 0.0
    %1533 = vmatpush.msra.mxu0 0.0
    %1534 = vmatpush.msra.mxu0 0.0
    %1535 = vmatpush.msra.mxu0 0.0
    %1536 = vmatpush.msra.mxu0 0.0
    %1537 = vmatpush.msra.mxu0 0.0
    %1538 = vmatpush.msra.mxu0 0.0
    %1539 = vmatpush.msra.mxu0 0.0
    %1540 = vmatpush.msra.mxu0 0.0
    %1541 = vmatpush.msra.mxu0 %v1521
    %1542 = vmatmul.f32.gmra.mxu0 %v1524
    %v1543 = vpop.f32.mrf.mxu0
    %v1544 = vadd.f32 0.0, %v1543
    %1545 = vdwg.mxu0
    %1548 = vrot.lane.b32.xlu0 %v1258, 8
    %v1549 = vpop.permute.xlu0 %1548
    %1550 = vrot.lane.b32.xlu0 %v1284, 8
    %v1551 = vpop.permute.xlu0 %1550
    %1556 = vrot.lane.b32.xlu0 %v1388, 16
    %v1557 = vpop.permute.xlu0 %1556
    %1558 = vrot.lane.b32.xlu0 %v1414, 16
    %v1559 = vpop.permute.xlu0 %1558
    %1564 = vrot.lane.b32.xlu0 %v1518, 24
    %v1565 = vpop.permute.xlu0 %1564
    %1566 = vrot.lane.b32.xlu0 %v1544, 24
    %v1567 = vpop.permute.xlu0 %1566
    %v1570 = vsel %vm181, %v1128, %v1549
    %v1571 = vsel %vm181, %v1154, %v1551
    %v1572 = vsel %vm723, %v1570, %v1557
    %v1573 = vsel %vm723, %v1571, %v1559
    %v1574 = vsel %vm726, %v1572, %v1565
    %v1575 = vsel %vm726, %v1573, %v1567
    %v1577 = vperm.slane %v961, 0
    %v1580 = vsel %vm148, %v1574, 0
    %v1583 = vsel %vm148, %v1575, 0
    %1585 = vmatpush.msra.mxu0 0.0
    %1586 = vmatpush.msra.mxu0 0.0
    %1587 = vmatpush.msra.mxu0 0.0
    %1588 = vmatpush.msra.mxu0 0.0
    %1589 = vmatpush.msra.mxu0 0.0
    %1590 = vmatpush.msra.mxu0 0.0
    %1591 = vmatpush.msra.mxu0 0.0
    %1592 = vmatpush.msra.mxu0 0.0
    %1593 = vmatpush.msra.mxu0 0.0
    %1594 = vmatpush.msra.mxu0 0.0
    %1595 = vmatpush.msra.mxu0 0.0
    %1596 = vmatpush.msra.mxu0 0.0
    %1597 = vmatpush.msra.mxu0 %v959
    %1598 = vmatpush.msra.mxu0 %v958
    %1599 = vmatpush.msra.mxu0 %v957
    %1600 = vmatpush.msra.mxu0 %v956
    %1601 = vmatmul.f32.gmra.mxu0 %v1580
    %v1602 = vpop.f32.mrf.mxu0
    %v1603 = vadd.f32 %v1577, %v1602
    %1604 = vmatmul.f32.gmra.mxu0 %v1583
    %v1605 = vpop.f32.mrf.mxu0
    %v1606 = vadd.f32 %v1577, %v1605
    %1607 = vdwg.mxu0
    %v1608 = vadd.f32 %v946, %v1603
    %v1609 = vadd.f32 %v947, %v1606
    %v1610 = vsel %vm148, %v1608, 0.0
    %1611 = vadd.xlane.f32.xlu0 %v1610
    %v1612 = vpop.xlane.xlu0 %1611
    %v1613 = vsel %vm148, %v1609, 0.0
    %1614 = vadd.xlane.f32.xlu0 %v1613
    %v1615 = vpop.xlane.xlu0 %1614
    %v1616 = vmul.f32 %v1612, %v775
    %v1617 = vmul.f32 %v1615, %v775
    %v1618 = vmul.f32 %v1608, %v1608
    %v1619 = vmul.f32 %v1609, %v1609
    %v1620 = vsel %vm148, %v1618, 0.0
    %1621 = vadd.xlane.f32.xlu0 %v1620
    %v1622 = vpop.xlane.xlu0 %1621
    %v1623 = vsel %vm148, %v1619, 0.0
    %1624 = vadd.xlane.f32.xlu0 %v1623
    %v1625 = vpop.xlane.xlu0 %1624
    %v1626 = vmul.f32 %v1622, %v775
    %v1627 = vmul.f32 %v1625, %v775
    %v1628 = vmul.f32 %v1616, %v1616
    %v1629 = vmul.f32 %v1617, %v1617
    %v1630 = vsub.f32 %v1626, %v1628
    %v1631 = vsub.f32 %v1627, %v1629
    %v1632 = vsub.f32 %v1608, %v1616
    %v1633 = vsub.f32 %v1609, %v1617
    %v1634 = vadd.f32 %v1630, 1e-05
    %v1635 = vadd.f32 %v1631, 1e-05
    %v1636 = vrsqrt.pop %v1634
    %v1637 = vmul.f32 %v1636, %v1634
    %v1638 = vmul.f32 %v1637, %v1636
    %v1639 = vmul.f32 0.5, %v1638
    %v1640 = vsub.f32 1.5, %v1639
    %v1641 = vmul.f32 %v1636, %v1640
    %vm1642 = vweird.f32 %v1634
    %vm1643 = vweird.f32 %v1636
    %vm1644 = vmor %vm1642, %vm1643
    %v1645 = vsel %vm1644, %v1636, %v1641
    %v1646 = vrsqrt.pop %v1635
    %v1647 = vmul.f32 %v1646, %v1635
    %v1648 = vmul.f32 %v1647, %v1646
    %v1649 = vmul.f32 0.5, %v1648
    %v1650 = vsub.f32 1.5, %v1649
    %v1651 = vmul.f32 %v1646, %v1650
    %vm1652 = vweird.f32 %v1635
    %vm1653 = vweird.f32 %v1646
    %vm1654 = vmor %vm1652, %vm1653
    %v1655 = vsel %vm1654, %v1646, %v1651
    %v1656 = vmul.f32 %v1632, %v1645
    %v1657 = vmul.f32 %v1633, %v1655
    %v1659 = vperm.slane %v963, 0
    %v1661 = vmul.f32 %v1656, %v1659
    %v1662 = vmul.f32 %v1657, %v1659
    %v1664 = vperm.slane %v965, 0
    %v1666 = vadd.f32 %v1661, %v1664
    %v1667 = vadd.f32 %v1662, %v1664
    %v1669 = vperm.slane %v976, 0
    %v1672 = vsel %vm148, %v1666, 0
    %v1675 = vsel %vm148, %v1667, 0
    %1677 = vmatpush.msra.mxu0 0.0
    %1678 = vmatpush.msra.mxu0 0.0
    %1679 = vmatpush.msra.mxu0 0.0
    %1680 = vmatpush.msra.mxu0 0.0
    %1681 = vmatpush.msra.mxu0 0.0
    %1682 = vmatpush.msra.mxu0 0.0
    %1683 = vmatpush.msra.mxu0 0.0
    %1684 = vmatpush.msra.mxu0 0.0
    %1685 = vmatpush.msra.mxu0 0.0
    %1686 = vmatpush.msra.mxu0 0.0
    %1687 = vmatpush.msra.mxu0 0.0
    %1688 = vmatpush.msra.mxu0 0.0
    %1689 = vmatpush.msra.mxu0 %v974
    %1690 = vmatpush.msra.mxu0 %v973
    %1691 = vmatpush.msra.mxu0 %v972
    %1692 = vmatpush.msra.mxu0 %v971
    %1693 = vmatmul.f32.gmra.mxu0 %v1672
    %v1694 = vpop.f32.mrf.mxu0
    %v1695 = vadd.f32 %v1669, %v1694
    %1696 = vmatmul.f32.gmra.mxu0 %v1675
    %v1697 = vpop.f32.mrf.mxu0
    %v1698 = vadd.f32 %v1669, %v1697
    %1699 = vdwg.mxu0
    %v1700 = vmax.f32 %v1695, 0.0
    %v1701 = vmax.f32 %v1698, 0.0
    %v1703 = vperm.slane %v995, 0
    %1705 = vmatpush.msra.mxu0 %v993
    %1706 = vmatpush.msra.mxu0 %v992
    %1707 = vmatpush.msra.mxu0 %v991
    %1708 = vmatpush.msra.mxu0 %v990
    %1709 = vmatpush.msra.mxu0 %v989
    %1710 = vmatpush.msra.mxu0 %v988
    %1711 = vmatpush.msra.mxu0 %v987
    %1712 = vmatpush.msra.mxu0 %v986
    %1713 = vmatpush.msra.mxu0 %v985
    %1714 = vmatpush.msra.mxu0 %v984
    %1715 = vmatpush.msra.mxu0 %v983
    %1716 = vmatpush.msra.mxu0 %v982
    %1717 = vmatpush.msra.mxu0 %v981
    %1718 = vmatpush.msra.mxu0 %v980
    %1719 = vmatpush.msra.mxu0 %v979
    %1720 = vmatpush.msra.mxu0 %v978
    %1721 = vmatmul.f32.gmra.mxu0 %v1700
    %v1722 = vpop.f32.mrf.mxu0
    %v1723 = vadd.f32 %v1703, %v1722
    %1724 = vmatmul.f32.gmra.mxu0 %v1701
    %v1725 = vpop.f32.mrf.mxu0
    %v1726 = vadd.f32 %v1703, %v1725
    %1727 = vdwg.mxu0
    %v1728 = vadd.f32 %v1666, %v1723
    %v1729 = vadd.f32 %v1667, %v1726
    %v1730 = vsel %vm148, %v1728, 0.0
    %1731 = vadd.xlane.f32.xlu0 %v1730
    %v1732 = vpop.xlane.xlu0 %1731
    %v1733 = vsel %vm148, %v1729, 0.0
    %1734 = vadd.xlane.f32.xlu0 %v1733
    %v1735 = vpop.xlane.xlu0 %1734
    %v1736 = vmul.f32 %v1732, %v775
    %v1737 = vmul.f32 %v1735, %v775
    %v1738 = vmul.f32 %v1728, %v1728
    %v1739 = vmul.f32 %v1729, %v1729
    %v1740 = vsel %vm148, %v1738, 0.0
    %1741 = vadd.xlane.f32.xlu0 %v1740
    %v1742 = vpop.xlane.xlu0 %1741
    %v1743 = vsel %vm148, %v1739, 0.0
    %1744 = vadd.xlane.f32.xlu0 %v1743
    %v1745 = vpop.xlane.xlu0 %1744
    %v1746 = vmul.f32 %v1742, %v775
    %v1747 = vmul.f32 %v1745, %v775
    %v1748 = vmul.f32 %v1736, %v1736
    %v1749 = vmul.f32 %v1737, %v1737
    %v1750 = vsub.f32 %v1746, %v1748
    %v1751 = vsub.f32 %v1747, %v1749
    %v1752 = vsub.f32 %v1728, %v1736
    %v1753 = vsub.f32 %v1729, %v1737
    %v1754 = vadd.f32 %v1750, 1e-05
    %v1755 = vadd.f32 %v1751, 1e-05
    %v1756 = vrsqrt.pop %v1754
    %v1757 = vmul.f32 %v1756, %v1754
    %v1758 = vmul.f32 %v1757, %v1756
    %v1759 = vmul.f32 0.5, %v1758
    %v1760 = vsub.f32 1.5, %v1759
    %v1761 = vmul.f32 %v1756, %v1760
    %vm1762 = vweird.f32 %v1754
    %vm1763 = vweird.f32 %v1756
    %vm1764 = vmor %vm1762, %vm1763
    %v1765 = vsel %vm1764, %v1756, %v1761
    %v1766 = vrsqrt.pop %v1755
    %v1767 = vmul.f32 %v1766, %v1755
    %v1768 = vmul.f32 %v1767, %v1766
    %v1769 = vmul.f32 0.5, %v1768
    %v1770 = vsub.f32 1.5, %v1769
    %v1771 = vmul.f32 %v1766, %v1770
    %vm1772 = vweird.f32 %v1755
    %vm1773 = vweird.f32 %v1766
    %vm1774 = vmor %vm1772, %vm1773
    %v1775 = vsel %vm1774, %v1766, %v1771
    %v1776 = vmul.f32 %v1752, %v1765
    %v1777 = vmul.f32 %v1753, %v1775
    %v1779 = vperm.slane %v967, 0
    %v1781 = vmul.f32 %v1776, %v1779
    %v1782 = vmul.f32 %v1777, %v1779
    %v1784 = vperm.slane %v969, 0
    %v1786 = vadd.f32 %v1781, %v1784
    %v1787 = vadd.f32 %v1782, %v1784
    %v1788 = vld [vmem:[%s2] sm:$0x3]
    %v1790 = vsel %vm723, %v1788, 0
    %1792 = vmatpush.msra.mxu0 0.0
    %1793 = vmatpush.msra.mxu0 0.0
    %1794 = vmatpush.msra.mxu0 0.0
    %1795 = vmatpush.msra.mxu0 0.0
    %1796 = vmatpush.msra.mxu0 0.0
    %1797 = vmatpush.msra.mxu0 0.0
    %1798 = vmatpush.msra.mxu0 0.0
    %1799 = vmatpush.msra.mxu0 0.0
    %1800 = vmatpush.msra.mxu0 0.0
    %1801 = vmatpush.msra.mxu0 0.0
    %1802 = vmatpush.msra.mxu0 0.0
    %1803 = vmatpush.msra.mxu0 0.0
    %1804 = vmatpush.msra.mxu0 0.0
    %1805 = vmatpush.msra.mxu0 0.0
    %1806 = vmatpush.msra.mxu0 %v1787
    %1807 = vmatpush.msra.mxu0 %v1786
    %1808 = vmatmul.f32.gmra.mxu0 %v1790
    %v1809 = vpop.f32.mrf.mxu0
    %v1810 = vadd.f32 0.0, %v1809
    %1811 = vdwg.mxu0
    %v1812 = vld [vmem:[%s16] sm:$0xff]
    %v1813 = vld [vmem:[%s16 + $0x8] sm:$0xff]
    %v1814 = vld [vmem:[%s16 + $0x10] sm:$0xff]
    %v1815 = vld [vmem:[%s16 + $0x18] sm:$0xff]
    %v1816 = vld [vmem:[%s17] sm:$0x1]
    %v1818 = vperm.slane %v1816, 0
    %v1821 = vsel %vm148, %v1810, 0
    %1823 = vmatpush.msra.mxu0 0.0
    %1824 = vmatpush.msra.mxu0 0.0
    %1825 = vmatpush.msra.mxu0 0.0
    %1826 = vmatpush.msra.mxu0 0.0
    %1827 = vmatpush.msra.mxu0 0.0
    %1828 = vmatpush.msra.mxu0 0.0
    %1829 = vmatpush.msra.mxu0 0.0
    %1830 = vmatpush.msra.mxu0 0.0
    %1831 = vmatpush.msra.mxu0 0.0
    %1832 = vmatpush.msra.mxu0 0.0
    %1833 = vmatpush.msra.mxu0 0.0
    %1834 = vmatpush.msra.mxu0 0.0
    %1835 = vmatpush.msra.mxu0 %v1815
    %1836 = vmatpush.msra.mxu0 %v1814
    %1837 = vmatpush.msra.mxu0 %v1813
    %1838 = vmatpush.msra.mxu0 %v1812
    %1839 = vmatmul.f32.gmra.mxu0 %v1821
    %v1840 = vpop.f32.mrf.mxu0
    %v1841 = vadd.f32 %v1818, %v1840
    %1842 = vdwg.mxu0
    %v1843 = vmax.f32 %v1841, 0.0
    %v1844 = vld [vmem:[%s18] sm:$0xff]
    %v1845 = vld [vmem:[%s18 + $0x8] sm:$0xff]
    %v1846 = vld [vmem:[%s18 + $0x10] sm:$0xff]
    %v1847 = vld [vmem:[%s18 + $0x18] sm:$0xff]
    %v1848 = vld [vmem:[%s18 + $0x20] sm:$0xff]
    %v1849 = vld [vmem:[%s18 + $0x28] sm:$0xff]
    %v1850 = vld [vmem:[%s18 + $0x30] sm:$0xff]
    %v1851 = vld [vmem:[%s18 + $0x38] sm:$0xff]
    %v1852 = vld [vmem:[%s18 + $0x40] sm:$0xff]
    %v1853 = vld [vmem:[%s18 + $0x48] sm:$0xff]
    %v1854 = vld [vmem:[%s18 + $0x50] sm:$0xff]
    %v1855 = vld [vmem:[%s18 + $0x58] sm:$0xff]
    %v1856 = vld [vmem:[%s18 + $0x60] sm:$0xff]
    %v1857 = vld [vmem:[%s18 + $0x68] sm:$0xff]
    %v1858 = vld [vmem:[%s18 + $0x70] sm:$0xff]
    %v1859 = vld [vmem:[%s18 + $0x78] sm:$0xff]
    %v1860 = vld [vmem:[%s19] sm:$0x1]
    %v1862 = vperm.slane %v1860, 0
    %1864 = vmatpush.msra.mxu0 %v1859
    %1865 = vmatpush.msra.mxu0 %v1858
    %1866 = vmatpush.msra.mxu0 %v1857
    %1867 = vmatpush.msra.mxu0 %v1856
    %1868 = vmatpush.msra.mxu0 %v1855
    %1869 = vmatpush.msra.mxu0 %v1854
    %1870 = vmatpush.msra.mxu0 %v1853
    %1871 = vmatpush.msra.mxu0 %v1852
    %1872 = vmatpush.msra.mxu0 %v1851
    %1873 = vmatpush.msra.mxu0 %v1850
    %1874 = vmatpush.msra.mxu0 %v1849
    %1875 = vmatpush.msra.mxu0 %v1848
    %1876 = vmatpush.msra.mxu0 %v1847
    %1877 = vmatpush.msra.mxu0 %v1846
    %1878 = vmatpush.msra.mxu0 %v1845
    %1879 = vmatpush.msra.mxu0 %v1844
    %1880 = vmatmul.f32.gmra.mxu0 %v1843
    %v1881 = vpop.f32.mrf.mxu0
    %v1882 = vadd.f32 %v1862, %v1881
    %1883 = vdwg.mxu0
    %1884 = vst [vmem:[#allocation2] sm:$0x3] %v1882
    // Predicated region
    $region82: #{tpu_custom_call.1} parent=1 // pred_check
      _
    $region83: #{tpu_custom_call.1} parent=1 // pred_check_branch
      %1886 = sbr.rel (0) target = $region85
    $region84: #{tpu_custom_call.1} parent=1 // pred_region
      %1888 = vsyncadd [#allocation3], 0
      %s1890 = sshll.u32 [#allocation2], 4
      %s1891 = int_to_ptr.vmem [resolvable:$true] %s1890
      %s1892 = sshll.u32 %s20, 4
      %s1893 = int_to_ptr.hbm [resolvable:$true] %s1892
      %1895 = dma.vmem_to_hbm [thread:$0]  %s1891, 32, %s1893, [#allocation3]
    $region85: #{tpu_custom_call.1} parent=1 // pred_fallthru
      _
    // Predicated region
    $region86: #{tpu_custom_call.1} parent=1 // pred_check
      _
    $region87: #{tpu_custom_call.1} parent=1 // pred_check_branch
      %1897 = sbr.rel (0) target = $region89
    $region88: #{tpu_custom_call.1} parent=1 // pred_region
      %1899 = dma.done [#allocation3], 32
    $region89: #{tpu_custom_call.1} parent=1 // pred_fallthru
      _
    %1900 = vsyncpa [#allocation3], 1

</llo_original>
